<compile_context>
chip_gen: v6e
topology: v6e:2x2x1
jax: 0.10.0
libtpu: 0.0.40
codegen_flags: <defaults>
</compile_context>

<pallas_src>
import functools

import jax
import jax.numpy as jnp
from jax.experimental import pallas as pl
from jax.experimental.pallas import tpu as pltpu

IN_F = 784
HID = 512
OUT_F = 10
OUT_PAD = 128  # lane-dense padded output width


def _round_up(x, m):
    return (x + m - 1) // m * m


def mlp_kernel(x_ref, w1_ref, b1_ref, w2_ref, b2_ref, o_ref):
    # first layer: (TB,784) @ (784,512) + (1,512)
    h = jnp.dot(x_ref[...], w1_ref[...], preferred_element_type=jnp.float32)
    h = h + b1_ref[...]
    # ReLU
    h = jnp.maximum(h, 0.0)
    # TODO(synk): nn.Dropout(p=0.2) is treated as identity (PyTorch eval-mode semantics);
    # the torch train-mode RNG mask is not reproducible here.
    # second layer (lane-dense padded): (TB,512) @ (512,128) + (1,128)
    z = jnp.dot(h, w2_ref[...], preferred_element_type=jnp.float32)
    z = z + b2_ref[...]
    # sigmoid (EUP transcendental path)
    s = jax.nn.sigmoid(z)
    # torch.round(res, decimals=4) -> round-half-to-even at 4 decimals
    o_ref[...] = jnp.round(s * 1.0e4) / 1.0e4


@functools.partial(jax.jit, static_argnames=("tb",))
def digit_classifier(x, w1_t, b1, w2_t_pad, b2_pad, *, tb=512):
    """x: (B, 784) f32.  w1_t: (784,512), b1: (1,512), w2_t_pad: (512,128), b2_pad: (1,128)."""
    B = x.shape[0]
    # Batch tile: big enough to amortize per-step overhead, small enough for v7x's
    # 32 MiB scoped VMEM; clamp for tiny batches (must stay a multiple of 8 sublanes).
    TB = min(tb, _round_up(B, 8))
    Bp = _round_up(B, TB)
    if Bp != B:
        x = jnp.pad(x, ((0, Bp - B), (0, 0)))
    grid = (Bp // TB,)

    # x/out double-buffered tiles + resident weights (+ headroom)
    vmem_bytes = (2 * TB * IN_F * 4 + 2 * TB * OUT_PAD * 4
                  + IN_F * HID * 4 + HID * 4 + HID * OUT_PAD * 4 + OUT_PAD * 4)
    vmem_limit = max(16 * 1024 * 1024, 2 * vmem_bytes)

    cost = pl.CostEstimate(
        flops=2 * Bp * IN_F * HID + 2 * Bp * HID * OUT_PAD,
        transcendentals=Bp * OUT_PAD,
        bytes_accessed=(Bp * IN_F * 4 + IN_F * HID * 4 + HID * 4
                        + HID * OUT_PAD * 4 + OUT_PAD * 4 + Bp * OUT_PAD * 4),
    )

    out_pad = pl.pallas_call(
        mlp_kernel,
        out_shape=jax.ShapeDtypeStruct((Bp, OUT_PAD), jnp.float32),
        grid_spec=pltpu.PrefetchScalarGridSpec(
            num_scalar_prefetch=0,
            grid=grid,
            in_specs=[
                pl.BlockSpec((TB, IN_F), lambda i: (i, 0)),       # x: tiled over batch
                pl.BlockSpec((IN_F, HID), lambda i: (0, 0)),      # w1_t: VMEM-resident
                pl.BlockSpec((1, HID), lambda i: (0, 0)),         # b1:   VMEM-resident
                pl.BlockSpec((HID, OUT_PAD), lambda i: (0, 0)),   # w2_t (padded): resident
                pl.BlockSpec((1, OUT_PAD), lambda i: (0, 0)),     # b2   (padded): resident
            ],
            out_specs=pl.BlockSpec((TB, OUT_PAD), lambda i: (i, 0)),
        ),
        compiler_params=pltpu.CompilerParams(
            dimension_semantics=("parallel",),
            vmem_limit_bytes=vmem_limit,
        ),
        cost_estimate=cost,
    )(x, w1_t, b1, w2_t_pad, b2_pad)

    return out_pad[:B, :OUT_F]


def init_params(key):
    # Deterministic init mimicking nn.Linear defaults:
    # U(-1/sqrt(fan_in), 1/sqrt(fan_in)) for weights and biases.
    k1, k2, k3, k4 = jax.random.split(key, 4)
    bound1 = 1.0 / jnp.sqrt(784.0)
    bound2 = 1.0 / jnp.sqrt(512.0)
    w1 = jax.random.uniform(k1, (HID, IN_F), jnp.float32, -bound1, bound1)
    b1 = jax.random.uniform(k2, (1, HID), jnp.float32, -bound1, bound1)
    w2 = jax.random.uniform(k3, (OUT_F, HID), jnp.float32, -bound2, bound2)
    b2 = jax.random.uniform(k4, (1, OUT_F), jnp.float32, -bound2, bound2)
    # Pre-transpose weights to (in, out) layout for the kernel.
    return w1.T, b1, w2.T, b2


def pad_second_layer(w2_t, b2):
    # Host-side, once: zero-pad the 10-wide output to 128 lanes (lane-dense stores,
    # full MXU lane utilization in the 2nd matmul; zero columns cost nothing).
    w2_t_pad = jnp.zeros((HID, OUT_PAD), jnp.float32).at[:, :OUT_F].set(w2_t)
    b2_pad = jnp.zeros((1, OUT_PAD), jnp.float32).at[:, :OUT_F].set(b2)
    return w2_t_pad, b2_pad


def reference(x, w1_t, b1, w2_t, b2):
    h = jnp.maximum(x @ w1_t + b1, 0.0)
    z = h @ w2_t + b2
    s = jax.nn.sigmoid(z)
    return jnp.round(s * 1.0e4) / 1.0e4


if __name__ == "__main__":
    key = jax.random.PRNGKey(0)
    kx, kp, kx2 = jax.random.split(key, 3)
    w1_t, b1, w2_t, b2 = init_params(kp)
    w2_t_pad, b2_pad = pad_second_layer(w2_t, b2)

    # Small-batch case (original spec-style shape): B=8 flattened 28*28 images.
    B = 8
    x = jax.random.uniform(kx, (B, IN_F), jnp.float32)
    out = digit_classifier(x, w1_t, b1, w2_t_pad, b2_pad)
    jax.block_until_ready(out)
    ref = reference(x, w1_t, b1, w2_t, b2)
    assert out.shape == (B, OUT_F)
    assert jnp.max(jnp.abs(out - ref)) <= 1e-4

    # Larger batch to exercise the tiled grid / resident-weight path (grid=(2,)).
    B2 = 1024
    x2 = jax.random.uniform(kx2, (B2, IN_F), jnp.float32)
    out2 = digit_classifier(x2, w1_t, b1, w2_t_pad, b2_pad)
    jax.block_until_ready(out2)
    ref2 = reference(x2, w1_t, b1, w2_t, b2)
    assert out2.shape == (B2, OUT_F)
    assert jnp.max(jnp.abs(out2 - ref2)) <= 1e-4

    print("KERNEL_OK")
</pallas_src>

<mosaic_0001>
module attributes {stable_mosaic.version = 11 : i64} {
  func.func @mlp_kernel(%arg0: i32, %arg1: memref<8x784xf32, #tpu.memory_space<vmem>>, %arg2: memref<784x512xf32, #tpu.memory_space<vmem>>, %arg3: memref<1x512xf32, #tpu.memory_space<vmem>>, %arg4: memref<512x128xf32, #tpu.memory_space<vmem>>, %arg5: memref<1x128xf32, #tpu.memory_space<vmem>>, %arg6: memref<8x128xf32, #tpu.memory_space<vmem>>) attributes {dimension_semantics = [#tpu.dimension_semantics<parallel>], iteration_bounds = array<i64: 1>, scalar_prefetch = 0 : i64, scratch_operands = 0 : i64, tpu.core_type = #tpu.core_type<tc>, window_params = [{transform_indices = @transform_0, window_bounds = array<i64: 8, 784>}, {pipeline_mode = #tpu.pipeline_mode<synchronous>, transform_indices = @transform_1, window_bounds = array<i64: 784, 512>}, {pipeline_mode = #tpu.pipeline_mode<synchronous>, transform_indices = @transform_2, window_bounds = array<i64: 1, 512>}, {pipeline_mode = #tpu.pipeline_mode<synchronous>, transform_indices = @transform_3, window_bounds = array<i64: 512, 128>}, {pipeline_mode = #tpu.pipeline_mode<synchronous>, transform_indices = @transform_4, window_bounds = array<i64: 1, 128>}, {transform_indices = @transform_5, window_bounds = array<i64: 8, 128>}]} {
    %c0 = arith.constant 0 : index
    %c0_0 = arith.constant 0 : index
    %0 = vector.load %arg1[%c0, %c0_0] : memref<8x784xf32, #tpu.memory_space<vmem>>, vector<8x784xf32>
    %c0_1 = arith.constant 0 : index
    %c0_2 = arith.constant 0 : index
    %1 = vector.load %arg2[%c0_1, %c0_2] : memref<784x512xf32, #tpu.memory_space<vmem>>, vector<784x512xf32>
    %cst = arith.constant dense<0.000000e+00> : vector<8x512xf32>
    %2 = tpu.matmul %0, %1, %cst {dimension_numbers = #tpu.dot_dimension_numbers<[1], [0], [0], [1], [0, 0, 1, 1], [], []>} : vector<8x784xf32>, vector<784x512xf32>, vector<8x512xf32> -> vector<8x512xf32>
    %c0_3 = arith.constant 0 : index
    %c0_4 = arith.constant 0 : index
    %3 = vector.load %arg3[%c0_3, %c0_4] : memref<1x512xf32, #tpu.memory_space<vmem>>, vector<1x512xf32>
    %4 = vector.broadcast %3 : vector<1x512xf32> to vector<8x512xf32>
    %5 = arith.addf %2, %4 : vector<8x512xf32>
    %cst_5 = arith.constant 0.000000e+00 : f32
    %6 = vector.broadcast %cst_5 : f32 to vector<8x512xf32>
    %7 = arith.maximumf %5, %6 : vector<8x512xf32>
    %c0_6 = arith.constant 0 : index
    %c0_7 = arith.constant 0 : index
    %8 = vector.load %arg4[%c0_6, %c0_7] : memref<512x128xf32, #tpu.memory_space<vmem>>, vector<512x128xf32>
    %cst_8 = arith.constant dense<0.000000e+00> : vector<8x128xf32>
    %9 = tpu.matmul %7, %8, %cst_8 {dimension_numbers = #tpu.dot_dimension_numbers<[1], [0], [0], [1], [0, 0, 1, 1], [], []>} : vector<8x512xf32>, vector<512x128xf32>, vector<8x128xf32> -> vector<8x128xf32>
    %c0_9 = arith.constant 0 : index
    %c0_10 = arith.constant 0 : index
    %10 = vector.load %arg5[%c0_9, %c0_10] : memref<1x128xf32, #tpu.memory_space<vmem>>, vector<1x128xf32>
    %11 = vector.broadcast %10 : vector<1x128xf32> to vector<8x128xf32>
    %12 = arith.addf %9, %11 : vector<8x128xf32>
    %13 = arith.negf %12 : vector<8x128xf32>
    %14 = math.exp %13 : vector<8x128xf32>
    %cst_11 = arith.constant 1.000000e+00 : f32
    %15 = vector.broadcast %cst_11 : f32 to vector<8x128xf32>
    %16 = arith.addf %15, %14 : vector<8x128xf32>
    %17 = arith.divf %15, %16 : vector<8x128xf32>
    %cst_12 = arith.constant 1.000000e+04 : f32
    %18 = vector.broadcast %cst_12 : f32 to vector<8x128xf32>
    %19 = arith.mulf %17, %18 : vector<8x128xf32>
    %20 = math.roundeven %19 : vector<8x128xf32>
    %cst_13 = arith.constant 1.000000e+04 : f32
    %21 = vector.broadcast %cst_13 : f32 to vector<8x128xf32>
    %22 = arith.divf %20, %21 : vector<8x128xf32>
    %c0_14 = arith.constant 0 : index
    %c0_15 = arith.constant 0 : index
    %23 = vector.load %arg6[%c0_14, %c0_15] : memref<8x128xf32, #tpu.memory_space<vmem>>, vector<8x128xf32>
    tpu.vector_store %arg6[%c0_14, %c0_15], %22 {strides = array<i32>} : memref<8x128xf32, #tpu.memory_space<vmem>>, vector<8x128xf32>,
    return
  }
  func.func @transform_0(%arg0: i32) -> (i32, i32) {
    %c0_i32 = arith.constant 0 : i32
    %c0_i32_0 = arith.constant 0 : i32
    return %arg0, %c0_i32 : i32, i32
  }
  func.func @transform_1(%arg0: i32) -> (i32, i32) {
    %c0_i32 = arith.constant 0 : i32
    %c0_i32_0 = arith.constant 0 : i32
    %c0_i32_1 = arith.constant 0 : i32
    return %c0_i32, %c0_i32_0 : i32, i32
  }
  func.func @transform_2(%arg0: i32) -> (i32, i32) {
    %c0_i32 = arith.constant 0 : i32
    %c0_i32_0 = arith.constant 0 : i32
    %c0_i32_1 = arith.constant 0 : i32
    return %c0_i32, %c0_i32_0 : i32, i32
  }
  func.func @transform_3(%arg0: i32) -> (i32, i32) {
    %c0_i32 = arith.constant 0 : i32
    %c0_i32_0 = arith.constant 0 : i32
    %c0_i32_1 = arith.constant 0 : i32
    return %c0_i32, %c0_i32_0 : i32, i32
  }
  func.func @transform_4(%arg0: i32) -> (i32, i32) {
    %c0_i32 = arith.constant 0 : i32
    %c0_i32_0 = arith.constant 0 : i32
    %c0_i32_1 = arith.constant 0 : i32
    return %c0_i32, %c0_i32_0 : i32, i32
  }
  func.func @transform_5(%arg0: i32) -> (i32, i32) {
    %c0_i32 = arith.constant 0 : i32
    %c0_i32_0 = arith.constant 0 : i32
    return %arg0, %c0_i32 : i32, i32
  }
}

</mosaic_0001>

<llo_original>
// kernel: digit_classifier.1
$region0: #{digit_classifier.1}
  #allocation0 [shape = 'u32[]', space=smem, size = 0x4, offset = 0x4, fixed_abs, tag = 'smem constant byte address 0x4 - core index']
  #allocation1 [shape = 'u32[144,128]{1,0:T(1,128)}', space=vmem, size = 0x12000, scoped, tag = 'internal scratch']
  %s0 = inlined_call_operand.hbm [shape: f32[8,784], index: 0, kind: input, shape index: {}]
  %s1 = inlined_call_operand.hbm [shape: f32[784,512], index: 1, kind: input, shape index: {}]
  %s2 = inlined_call_operand.hbm [shape: f32[1,512], index: 2, kind: input, shape index: {}]
  %s3 = inlined_call_operand.hbm [shape: f32[512,128], index: 3, kind: input, shape index: {}]
  %s4 = inlined_call_operand.hbm [shape: f32[1,128], index: 4, kind: input, shape index: {}]
  %s5 = inlined_call_operand.hbm [shape: f32[8,128], index: 5, kind: output, shape index: {}]
  %s6 = sld [smem:[#allocation0]]
  $region50: #{digit_classifier.1} parent=0
    _
  %s8 = ssub.s32 1, %s6
  %s9 = scalar_select 0, %s8, %s6
  $region1: #{digit_classifier.1} parent=0
    #allocation2 [shape = 'u8[28672]{0}', space=vmem, size = 0x7000, scoped, tag = 'input window, operand 0, single buffered']
    #allocation3 [shape = 's32[1]{0}', space=sflag, size = 0x4, scoped, tag = 'scoped memory for digit_classifier.1']
    #allocation4 [shape = 's32[1]{0}', space=sflag, size = 0x4, scoped, tag = 'scoped memory for digit_classifier.1']
    #allocation5 [shape = 'u8[1605632]{0}', space=vmem, size = 0x188000, scoped, tag = 'input window, operand 1, single buffered']
    #allocation6 [shape = 's32[1]{0}', space=sflag, size = 0x4, scoped, tag = 'scoped memory for digit_classifier.1']
    #allocation7 [shape = 'u8[2048]{0}', space=vmem, size = 0x800, scoped, tag = 'input window, operand 2, single buffered']
    #allocation8 [shape = 'u8[262144]{0}', space=vmem, size = 0x40000, scoped, tag = 'input window, operand 3, single buffered']
    #allocation9 [shape = 's32[1]{0}', space=sflag, size = 0x4, scoped, tag = 'scoped memory for digit_classifier.1']
    #allocation10 [shape = 'u8[512]{0}', space=vmem, size = 0x400, scoped, tag = 'input window, operand 4, single buffered']
    #allocation11 [shape = 'u8[4096]{0}', space=vmem, size = 0x1000, scoped, tag = 'output window, operand 0, single buffered']
    %10 = vsyncpa [#allocation3], 0
    %11 = vsyncpa [#allocation6], 0
    %12 = vsyncpa [#allocation9], 0
    %13 = vsyncpa [#allocation4], 0
    // Predicated region
    $region2: #{digit_classifier.1} parent=1 // pred_check
      _
    $region3: #{digit_classifier.1} parent=1 // pred_check_branch
      %15 = sbr.rel (0) target = $region5
    $region4: #{digit_classifier.1} parent=1 // pred_region
      %s17 = ssub.s32 896, 896
      %18 = vsyncadd [#allocation3], %s17
      %s20 = sshll.u32 [#allocation2], 4
      %s21 = int_to_ptr.vmem [resolvable:$true] %s20
      %23 = dma.hbm_to_vmem [thread:$0]  %s0, 896, %s21, [#allocation3]
    $region5: #{digit_classifier.1} parent=1 // pred_fallthru
      _
    // Predicated region
    $region6: #{digit_classifier.1} parent=1 // pred_check
      _
    $region7: #{digit_classifier.1} parent=1 // pred_check_branch
      %25 = sbr.rel (0) target = $region9
    $region8: #{digit_classifier.1} parent=1 // pred_region
      %s27 = ssub.s32 50176, 50176
      %28 = vsyncadd [#allocation6], %s27
      %s29 = sshll.u32 [#allocation5], 4
      %s30 = int_to_ptr.vmem [resolvable:$true] %s29
      %35 = dma.hbm_to_vmem [thread:$0]  %s1, 50176, %s30, [#allocation6], 512, 512, 32
    $region9: #{digit_classifier.1} parent=1 // pred_fallthru
      _
    // Predicated region
    $region10: #{digit_classifier.1} parent=1 // pred_check
      _
    $region11: #{digit_classifier.1} parent=1 // pred_check_branch
      %37 = sbr.rel (0) target = $region13
    $region12: #{digit_classifier.1} parent=1 // pred_region
      %s39 = ssub.s32 64, 64
      %40 = vsyncadd [#allocation6], %s39
      %s42 = sshll.u32 [#allocation7], 4
      %s43 = int_to_ptr.vmem [resolvable:$true] %s42
      %45 = dma.hbm_to_vmem [thread:$0]  %s2, 64, %s43, [#allocation6]
    $region13: #{digit_classifier.1} parent=1 // pred_fallthru
      _
    // Predicated region
    $region14: #{digit_classifier.1} parent=1 // pred_check
      _
    $region15: #{digit_classifier.1} parent=1 // pred_check_branch
      %47 = sbr.rel (0) target = $region17
    $region16: #{digit_classifier.1} parent=1 // pred_region
      %s49 = ssub.s32 8192, 8192
      %50 = vsyncadd [#allocation9], %s49
      %s51 = sshll.u32 [#allocation8], 4
      %s52 = int_to_ptr.vmem [resolvable:$true] %s51
      %57 = dma.hbm_to_vmem [thread:$0]  %s3, 8192, %s52, [#allocation9], 128, 128, 8
    $region17: #{digit_classifier.1} parent=1 // pred_fallthru
      _
    // Predicated region
    $region18: #{digit_classifier.1} parent=1 // pred_check
      _
    $region19: #{digit_classifier.1} parent=1 // pred_check_branch
      %59 = sbr.rel (0) target = $region21
    $region20: #{digit_classifier.1} parent=1 // pred_region
      %s61 = ssub.s32 16, 16
      %62 = vsyncadd [#allocation9], %s61
      %s64 = sshll.u32 [#allocation10], 4
      %s65 = int_to_ptr.vmem [resolvable:$true] %s64
      %67 = dma.hbm_to_vmem [thread:$0]  %s4, 16, %s65, [#allocation9]
    $region21: #{digit_classifier.1} parent=1 // pred_fallthru
      _
    // Predicated region
    $region22: #{digit_classifier.1} parent=1 // pred_check
      _
    $region23: #{digit_classifier.1} parent=1 // pred_check_branch
      %69 = sbr.rel (0) target = $region25
    $region24: #{digit_classifier.1} parent=1 // pred_region
      %70 = dma.done [#allocation3], 896
    $region25: #{digit_classifier.1} parent=1 // pred_fallthru
      _
    // Predicated region
    $region26: #{digit_classifier.1} parent=1 // pred_check
      _
    $region27: #{digit_classifier.1} parent=1 // pred_check_branch
      %72 = sbr.rel (0) target = $region29
    $region28: #{digit_classifier.1} parent=1 // pred_region
      %73 = dma.done [#allocation6], 50176
    $region29: #{digit_classifier.1} parent=1 // pred_fallthru
      _
    // Predicated region
    $region30: #{digit_classifier.1} parent=1 // pred_check
      _
    $region31: #{digit_classifier.1} parent=1 // pred_check_branch
      %75 = sbr.rel (0) target = $region33
    $region32: #{digit_classifier.1} parent=1 // pred_region
      %76 = dma.done [#allocation6], 64
    $region33: #{digit_classifier.1} parent=1 // pred_fallthru
      _
    // Predicated region
    $region34: #{digit_classifier.1} parent=1 // pred_check
      _
    $region35: #{digit_classifier.1} parent=1 // pred_check_branch
      %78 = sbr.rel (0) target = $region37
    $region36: #{digit_classifier.1} parent=1 // pred_region
      %79 = dma.done [#allocation9], 8192
    $region37: #{digit_classifier.1} parent=1 // pred_fallthru
      _
    // Predicated region
    $region38: #{digit_classifier.1} parent=1 // pred_check
      _
    $region39: #{digit_classifier.1} parent=1 // pred_check_branch
      %81 = sbr.rel (0) target = $region41
    $region40: #{digit_classifier.1} parent=1 // pred_region
      %82 = dma.done [#allocation9], 16
    $region41: #{digit_classifier.1} parent=1 // pred_fallthru
      _
    %v83 = vld [vmem:[#allocation2] sm:$0xff]
    %v84 = vld [vmem:[#allocation2 + $0x8] sm:$0xff]
    %v85 = vld [vmem:[#allocation2 + $0x10] sm:$0xff]
    %v86 = vld [vmem:[#allocation2 + $0x18] sm:$0xff]
    %v87 = vld [vmem:[#allocation2 + $0x20] sm:$0xff]
    %v88 = vld [vmem:[#allocation2 + $0x28] sm:$0xff]
    %v89 = vld [vmem:[#allocation2 + $0x30] sm:$0xff]
    %v90 = vld [vmem:[#allocation5] sm:$0xff]
    %v91 = vld [vmem:[#allocation5 + $0x8] sm:$0xff]
    %v92 = vld [vmem:[#allocation5 + $0x10] sm:$0xff]
    %v93 = vld [vmem:[#allocation5 + $0x18] sm:$0xff]
    %v94 = vld [vmem:[#allocation5 + $0x20] sm:$0xff]
    %v95 = vld [vmem:[#allocation5 + $0x28] sm:$0xff]
    %v96 = vld [vmem:[#allocation5 + $0x30] sm:$0xff]
    %v97 = vld [vmem:[#allocation5 + $0x38] sm:$0xff]
    %v98 = vld [vmem:[#allocation5 + $0x40] sm:$0xff]
    %v99 = vld [vmem:[#allocation5 + $0x48] sm:$0xff]
    %v100 = vld [vmem:[#allocation5 + $0x50] sm:$0xff]
    %v101 = vld [vmem:[#allocation5 + $0x58] sm:$0xff]
    %v102 = vld [vmem:[#allocation5 + $0x60] sm:$0xff]
    %v103 = vld [vmem:[#allocation5 + $0x68] sm:$0xff]
    %v104 = vld [vmem:[#allocation5 + $0x70] sm:$0xff]
    %v105 = vld [vmem:[#allocation5 + $0x78] sm:$0xff]
    %v106 = vld [vmem:[#allocation5 + $0x80] sm:$0xff]
    %v107 = vld [vmem:[#allocation5 + $0x88] sm:$0xff]
    %v108 = vld [vmem:[#allocation5 + $0x90] sm:$0xff]
    %v109 = vld [vmem:[#allocation5 + $0x98] sm:$0xff]
    %v110 = vld [vmem:[#allocation5 + $0xa0] sm:$0xff]
    %v111 = vld [vmem:[#allocation5 + $0xa8] sm:$0xff]
    %v112 = vld [vmem:[#allocation5 + $0xb0] sm:$0xff]
    %v113 = vld [vmem:[#allocation5 + $0xb8] sm:$0xff]
    %v114 = vld [vmem:[#allocation5 + $0xc0] sm:$0xff]
    %v115 = vld [vmem:[#allocation5 + $0xc8] sm:$0xff]
    %v116 = vld [vmem:[#allocation5 + $0xd0] sm:$0xff]
    %v117 = vld [vmem:[#allocation5 + $0xd8] sm:$0xff]
    %v118 = vld [vmem:[#allocation5 + $0xe0] sm:$0xff]
    %v119 = vld [vmem:[#allocation5 + $0xe8] sm:$0xff]
    %v120 = vld [vmem:[#allocation5 + $0xf0] sm:$0xff]
    %v121 = vld [vmem:[#allocation5 + $0xf8] sm:$0xff]
    %v122 = vld [vmem:[#allocation5 + $0x100] sm:$0xff]
    %v123 = vld [vmem:[#allocation5 + $0x108] sm:$0xff]
    %v124 = vld [vmem:[#allocation5 + $0x110] sm:$0xff]
    %v125 = vld [vmem:[#allocation5 + $0x118] sm:$0xff]
    %v126 = vld [vmem:[#allocation5 + $0x120] sm:$0xff]
    %v127 = vld [vmem:[#allocation5 + $0x128] sm:$0xff]
    %v128 = vld [vmem:[#allocation5 + $0x130] sm:$0xff]
    %v129 = vld [vmem:[#allocation5 + $0x138] sm:$0xff]
    %v130 = vld [vmem:[#allocation5 + $0x140] sm:$0xff]
    %v131 = vld [vmem:[#allocation5 + $0x148] sm:$0xff]
    %v132 = vld [vmem:[#allocation5 + $0x150] sm:$0xff]
    %v133 = vld [vmem:[#allocation5 + $0x158] sm:$0xff]
    %v134 = vld [vmem:[#allocation5 + $0x160] sm:$0xff]
    %v135 = vld [vmem:[#allocation5 + $0x168] sm:$0xff]
    %v136 = vld [vmem:[#allocation5 + $0x170] sm:$0xff]
    %v137 = vld [vmem:[#allocation5 + $0x178] sm:$0xff]
    %v138 = vld [vmem:[#allocation5 + $0x180] sm:$0xff]
    %v139 = vld [vmem:[#allocation5 + $0x188] sm:$0xff]
    %v140 = vld [vmem:[#allocation5 + $0x190] sm:$0xff]
    %v141 = vld [vmem:[#allocation5 + $0x198] sm:$0xff]
    %v142 = vld [vmem:[#allocation5 + $0x1a0] sm:$0xff]
    %v143 = vld [vmem:[#allocation5 + $0x1a8] sm:$0xff]
    %v144 = vld [vmem:[#allocation5 + $0x1b0] sm:$0xff]
    %v145 = vld [vmem:[#allocation5 + $0x1b8] sm:$0xff]
    %v146 = vld [vmem:[#allocation5 + $0x1c0] sm:$0xff]
    %v147 = vld [vmem:[#allocation5 + $0x1c8] sm:$0xff]
    %v148 = vld [vmem:[#allocation5 + $0x1d0] sm:$0xff]
    %v149 = vld [vmem:[#allocation5 + $0x1d8] sm:$0xff]
    %v150 = vld [vmem:[#allocation5 + $0x1e0] sm:$0xff]
    %v151 = vld [vmem:[#allocation5 + $0x1e8] sm:$0xff]
    %v152 = vld [vmem:[#allocation5 + $0x1f0] sm:$0xff]
    %v153 = vld [vmem:[#allocation5 + $0x1f8] sm:$0xff]
    %v154 = vld [vmem:[#allocation5 + $0x200] sm:$0xff]
    %v155 = vld [vmem:[#allocation5 + $0x208] sm:$0xff]
    %v156 = vld [vmem:[#allocation5 + $0x210] sm:$0xff]
    %v157 = vld [vmem:[#allocation5 + $0x218] sm:$0xff]
    %v158 = vld [vmem:[#allocation5 + $0x220] sm:$0xff]
    %v159 = vld [vmem:[#allocation5 + $0x228] sm:$0xff]
    %v160 = vld [vmem:[#allocation5 + $0x230] sm:$0xff]
    %v161 = vld [vmem:[#allocation5 + $0x238] sm:$0xff]
    %v162 = vld [vmem:[#allocation5 + $0x240] sm:$0xff]
    %v163 = vld [vmem:[#allocation5 + $0x248] sm:$0xff]
    %v164 = vld [vmem:[#allocation5 + $0x250] sm:$0xff]
    %v165 = vld [vmem:[#allocation5 + $0x258] sm:$0xff]
    %v166 = vld [vmem:[#allocation5 + $0x260] sm:$0xff]
    %v167 = vld [vmem:[#allocation5 + $0x268] sm:$0xff]
    %v168 = vld [vmem:[#allocation5 + $0x270] sm:$0xff]
    %v169 = vld [vmem:[#allocation5 + $0x278] sm:$0xff]
    %v170 = vld [vmem:[#allocation5 + $0x280] sm:$0xff]
    %v171 = vld [vmem:[#allocation5 + $0x288] sm:$0xff]
    %v172 = vld [vmem:[#allocation5 + $0x290] sm:$0xff]
    %v173 = vld [vmem:[#allocation5 + $0x298] sm:$0xff]
    %v174 = vld [vmem:[#allocation5 + $0x2a0] sm:$0xff]
    %v175 = vld [vmem:[#allocation5 + $0x2a8] sm:$0xff]
    %v176 = vld [vmem:[#allocation5 + $0x2b0] sm:$0xff]
    %v177 = vld [vmem:[#allocation5 + $0x2b8] sm:$0xff]
    %v178 = vld [vmem:[#allocation5 + $0x2c0] sm:$0xff]
    %v179 = vld [vmem:[#allocation5 + $0x2c8] sm:$0xff]
    %v180 = vld [vmem:[#allocation5 + $0x2d0] sm:$0xff]
    %v181 = vld [vmem:[#allocation5 + $0x2d8] sm:$0xff]
    %v182 = vld [vmem:[#allocation5 + $0x2e0] sm:$0xff]
    %v183 = vld [vmem:[#allocation5 + $0x2e8] sm:$0xff]
    %v184 = vld [vmem:[#allocation5 + $0x2f0] sm:$0xff]
    %v185 = vld [vmem:[#allocation5 + $0x2f8] sm:$0xff]
    %v186 = vld [vmem:[#allocation5 + $0x300] sm:$0xff]
    %v187 = vld [vmem:[#allocation5 + $0x308] sm:$0xff]
    %v188 = vld [vmem:[#allocation5 + $0x310] sm:$0xff]
    %v189 = vld [vmem:[#allocation5 + $0x318] sm:$0xff]
    %v190 = vld [vmem:[#allocation5 + $0x320] sm:$0xff]
    %v191 = vld [vmem:[#allocation5 + $0x328] sm:$0xff]
    %v192 = vld [vmem:[#allocation5 + $0x330] sm:$0xff]
    %v193 = vld [vmem:[#allocation5 + $0x338] sm:$0xff]
    %v194 = vld [vmem:[#allocation5 + $0x340] sm:$0xff]
    %v195 = vld [vmem:[#allocation5 + $0x348] sm:$0xff]
    %v196 = vld [vmem:[#allocation5 + $0x350] sm:$0xff]
    %v197 = vld [vmem:[#allocation5 + $0x358] sm:$0xff]
    %v198 = vld [vmem:[#allocation5 + $0x360] sm:$0xff]
    %v199 = vld [vmem:[#allocation5 + $0x368] sm:$0xff]
    %v200 = vld [vmem:[#allocation5 + $0x370] sm:$0xff]
    %v201 = vld [vmem:[#allocation5 + $0x378] sm:$0xff]
    %v202 = vld [vmem:[#allocation5 + $0x380] sm:$0xff]
    %v203 = vld [vmem:[#allocation5 + $0x388] sm:$0xff]
    %v204 = vld [vmem:[#allocation5 + $0x390] sm:$0xff]
    %v205 = vld [vmem:[#allocation5 + $0x398] sm:$0xff]
    %v206 = vld [vmem:[#allocation5 + $0x3a0] sm:$0xff]
    %v207 = vld [vmem:[#allocation5 + $0x3a8] sm:$0xff]
    %v208 = vld [vmem:[#allocation5 + $0x3b0] sm:$0xff]
    %v209 = vld [vmem:[#allocation5 + $0x3b8] sm:$0xff]
    %v210 = vld [vmem:[#allocation5 + $0x3c0] sm:$0xff]
    %v211 = vld [vmem:[#allocation5 + $0x3c8] sm:$0xff]
    %v212 = vld [vmem:[#allocation5 + $0x3d0] sm:$0xff]
    %v213 = vld [vmem:[#allocation5 + $0x3d8] sm:$0xff]
    %v214 = vld [vmem:[#allocation5 + $0x3e0] sm:$0xff]
    %v215 = vld [vmem:[#allocation5 + $0x3e8] sm:$0xff]
    %v216 = vld [vmem:[#allocation5 + $0x3f0] sm:$0xff]
    %v217 = vld [vmem:[#allocation5 + $0x3f8] sm:$0xff]
    %v218 = vld [vmem:[#allocation5 + $0x400] sm:$0xff]
    %v219 = vld [vmem:[#allocation5 + $0x408] sm:$0xff]
    %v220 = vld [vmem:[#allocation5 + $0x410] sm:$0xff]
    %v221 = vld [vmem:[#allocation5 + $0x418] sm:$0xff]
    %v222 = vld [vmem:[#allocation5 + $0x420] sm:$0xff]
    %v223 = vld [vmem:[#allocation5 + $0x428] sm:$0xff]
    %v224 = vld [vmem:[#allocation5 + $0x430] sm:$0xff]
    %v225 = vld [vmem:[#allocation5 + $0x438] sm:$0xff]
    %v226 = vld [vmem:[#allocation5 + $0x440] sm:$0xff]
    %v227 = vld [vmem:[#allocation5 + $0x448] sm:$0xff]
    %v228 = vld [vmem:[#allocation5 + $0x450] sm:$0xff]
    %v229 = vld [vmem:[#allocation5 + $0x458] sm:$0xff]
    %v230 = vld [vmem:[#allocation5 + $0x460] sm:$0xff]
    %v231 = vld [vmem:[#allocation5 + $0x468] sm:$0xff]
    %v232 = vld [vmem:[#allocation5 + $0x470] sm:$0xff]
    %v233 = vld [vmem:[#allocation5 + $0x478] sm:$0xff]
    %v234 = vld [vmem:[#allocation5 + $0x480] sm:$0xff]
    %v235 = vld [vmem:[#allocation5 + $0x488] sm:$0xff]
    %v236 = vld [vmem:[#allocation5 + $0x490] sm:$0xff]
    %v237 = vld [vmem:[#allocation5 + $0x498] sm:$0xff]
    %v238 = vld [vmem:[#allocation5 + $0x4a0] sm:$0xff]
    %v239 = vld [vmem:[#allocation5 + $0x4a8] sm:$0xff]
    %v240 = vld [vmem:[#allocation5 + $0x4b0] sm:$0xff]
    %v241 = vld [vmem:[#allocation5 + $0x4b8] sm:$0xff]
    %v242 = vld [vmem:[#allocation5 + $0x4c0] sm:$0xff]
    %v243 = vld [vmem:[#allocation5 + $0x4c8] sm:$0xff]
    %v244 = vld [vmem:[#allocation5 + $0x4d0] sm:$0xff]
    %v245 = vld [vmem:[#allocation5 + $0x4d8] sm:$0xff]
    %v246 = vld [vmem:[#allocation5 + $0x4e0] sm:$0xff]
    %v247 = vld [vmem:[#allocation5 + $0x4e8] sm:$0xff]
    %v248 = vld [vmem:[#allocation5 + $0x4f0] sm:$0xff]
    %v249 = vld [vmem:[#allocation5 + $0x4f8] sm:$0xff]
    %v250 = vld [vmem:[#allocation5 + $0x500] sm:$0xff]
    %v251 = vld [vmem:[#allocation5 + $0x508] sm:$0xff]
    %v252 = vld [vmem:[#allocation5 + $0x510] sm:$0xff]
    %v253 = vld [vmem:[#allocation5 + $0x518] sm:$0xff]
    %v254 = vld [vmem:[#allocation5 + $0x520] sm:$0xff]
    %v255 = vld [vmem:[#allocation5 + $0x528] sm:$0xff]
    %v256 = vld [vmem:[#allocation5 + $0x530] sm:$0xff]
    %v257 = vld [vmem:[#allocation5 + $0x538] sm:$0xff]
    %v258 = vld [vmem:[#allocation5 + $0x540] sm:$0xff]
    %v259 = vld [vmem:[#allocation5 + $0x548] sm:$0xff]
    %v260 = vld [vmem:[#allocation5 + $0x550] sm:$0xff]
    %v261 = vld [vmem:[#allocation5 + $0x558] sm:$0xff]
    %v262 = vld [vmem:[#allocation5 + $0x560] sm:$0xff]
    %v263 = vld [vmem:[#allocation5 + $0x568] sm:$0xff]
    %v264 = vld [vmem:[#allocation5 + $0x570] sm:$0xff]
    %v265 = vld [vmem:[#allocation5 + $0x578] sm:$0xff]
    %v266 = vld [vmem:[#allocation5 + $0x580] sm:$0xff]
    %v267 = vld [vmem:[#allocation5 + $0x588] sm:$0xff]
    %v268 = vld [vmem:[#allocation5 + $0x590] sm:$0xff]
    %v269 = vld [vmem:[#allocation5 + $0x598] sm:$0xff]
    %v270 = vld [vmem:[#allocation5 + $0x5a0] sm:$0xff]
    %v271 = vld [vmem:[#allocation5 + $0x5a8] sm:$0xff]
    %v272 = vld [vmem:[#allocation5 + $0x5b0] sm:$0xff]
    %v273 = vld [vmem:[#allocation5 + $0x5b8] sm:$0xff]
    %v274 = vld [vmem:[#allocation5 + $0x5c0] sm:$0xff]
    %v275 = vld [vmem:[#allocation5 + $0x5c8] sm:$0xff]
    %v276 = vld [vmem:[#allocation5 + $0x5d0] sm:$0xff]
    %v277 = vld [vmem:[#allocation5 + $0x5d8] sm:$0xff]
    %v278 = vld [vmem:[#allocation5 + $0x5e0] sm:$0xff]
    %v279 = vld [vmem:[#allocation5 + $0x5e8] sm:$0xff]
    %v280 = vld [vmem:[#allocation5 + $0x5f0] sm:$0xff]
    %v281 = vld [vmem:[#allocation5 + $0x5f8] sm:$0xff]
    %v282 = vld [vmem:[#allocation5 + $0x600] sm:$0xff]
    %v283 = vld [vmem:[#allocation5 + $0x608] sm:$0xff]
    %v284 = vld [vmem:[#allocation5 + $0x610] sm:$0xff]
    %v285 = vld [vmem:[#allocation5 + $0x618] sm:$0xff]
    %v286 = vld [vmem:[#allocation5 + $0x620] sm:$0xff]
    %v287 = vld [vmem:[#allocation5 + $0x628] sm:$0xff]
    %v288 = vld [vmem:[#allocation5 + $0x630] sm:$0xff]
    %v289 = vld [vmem:[#allocation5 + $0x638] sm:$0xff]
    %v290 = vld [vmem:[#allocation5 + $0x640] sm:$0xff]
    %v291 = vld [vmem:[#allocation5 + $0x648] sm:$0xff]
    %v292 = vld [vmem:[#allocation5 + $0x650] sm:$0xff]
    %v293 = vld [vmem:[#allocation5 + $0x658] sm:$0xff]
    %v294 = vld [vmem:[#allocation5 + $0x660] sm:$0xff]
    %v295 = vld [vmem:[#allocation5 + $0x668] sm:$0xff]
    %v296 = vld [vmem:[#allocation5 + $0x670] sm:$0xff]
    %v297 = vld [vmem:[#allocation5 + $0x678] sm:$0xff]
    %v298 = vld [vmem:[#allocation5 + $0x680] sm:$0xff]
    %v299 = vld [vmem:[#allocation5 + $0x688] sm:$0xff]
    %v300 = vld [vmem:[#allocation5 + $0x690] sm:$0xff]
    %v301 = vld [vmem:[#allocation5 + $0x698] sm:$0xff]
    %v302 = vld [vmem:[#allocation5 + $0x6a0] sm:$0xff]
    %v303 = vld [vmem:[#allocation5 + $0x6a8] sm:$0xff]
    %v304 = vld [vmem:[#allocation5 + $0x6b0] sm:$0xff]
    %v305 = vld [vmem:[#allocation5 + $0x6b8] sm:$0xff]
    %v306 = vld [vmem:[#allocation5 + $0x6c0] sm:$0xff]
    %v307 = vld [vmem:[#allocation5 + $0x6c8] sm:$0xff]
    %v308 = vld [vmem:[#allocation5 + $0x6d0] sm:$0xff]
    %v309 = vld [vmem:[#allocation5 + $0x6d8] sm:$0xff]
    %v310 = vld [vmem:[#allocation5 + $0x6e0] sm:$0xff]
    %v311 = vld [vmem:[#allocation5 + $0x6e8] sm:$0xff]
    %v312 = vld [vmem:[#allocation5 + $0x6f0] sm:$0xff]
    %v313 = vld [vmem:[#allocation5 + $0x6f8] sm:$0xff]
    %v314 = vld [vmem:[#allocation5 + $0x700] sm:$0xff]
    %v315 = vld [vmem:[#allocation5 + $0x708] sm:$0xff]
    %v316 = vld [vmem:[#allocation5 + $0x710] sm:$0xff]
    %v317 = vld [vmem:[#allocation5 + $0x718] sm:$0xff]
    %v318 = vld [vmem:[#allocation5 + $0x720] sm:$0xff]
    %v319 = vld [vmem:[#allocation5 + $0x728] sm:$0xff]
    %v320 = vld [vmem:[#allocation5 + $0x730] sm:$0xff]
    %v321 = vld [vmem:[#allocation5 + $0x738] sm:$0xff]
    %v322 = vld [vmem:[#allocation5 + $0x740] sm:$0xff]
    %v323 = vld [vmem:[#allocation5 + $0x748] sm:$0xff]
    %v324 = vld [vmem:[#allocation5 + $0x750] sm:$0xff]
    %v325 = vld [vmem:[#allocation5 + $0x758] sm:$0xff]
    %v326 = vld [vmem:[#allocation5 + $0x760] sm:$0xff]
    %v327 = vld [vmem:[#allocation5 + $0x768] sm:$0xff]
    %v328 = vld [vmem:[#allocation5 + $0x770] sm:$0xff]
    %v329 = vld [vmem:[#allocation5 + $0x778] sm:$0xff]
    %v330 = vld [vmem:[#allocation5 + $0x780] sm:$0xff]
    %v331 = vld [vmem:[#allocation5 + $0x788] sm:$0xff]
    %v332 = vld [vmem:[#allocation5 + $0x790] sm:$0xff]
    %v333 = vld [vmem:[#allocation5 + $0x798] sm:$0xff]
    %v334 = vld [vmem:[#allocation5 + $0x7a0] sm:$0xff]
    %v335 = vld [vmem:[#allocation5 + $0x7a8] sm:$0xff]
    %v336 = vld [vmem:[#allocation5 + $0x7b0] sm:$0xff]
    %v337 = vld [vmem:[#allocation5 + $0x7b8] sm:$0xff]
    %v338 = vld [vmem:[#allocation5 + $0x7c0] sm:$0xff]
    %v339 = vld [vmem:[#allocation5 + $0x7c8] sm:$0xff]
    %v340 = vld [vmem:[#allocation5 + $0x7d0] sm:$0xff]
    %v341 = vld [vmem:[#allocation5 + $0x7d8] sm:$0xff]
    %v342 = vld [vmem:[#allocation5 + $0x7e0] sm:$0xff]
    %v343 = vld [vmem:[#allocation5 + $0x7e8] sm:$0xff]
    %v344 = vld [vmem:[#allocation5 + $0x7f0] sm:$0xff]
    %v345 = vld [vmem:[#allocation5 + $0x7f8] sm:$0xff]
    %v346 = vld [vmem:[#allocation5 + $0x800] sm:$0xff]
    %v347 = vld [vmem:[#allocation5 + $0x808] sm:$0xff]
    %v348 = vld [vmem:[#allocation5 + $0x810] sm:$0xff]
    %v349 = vld [vmem:[#allocation5 + $0x818] sm:$0xff]
    %v350 = vld [vmem:[#allocation5 + $0x820] sm:$0xff]
    %v351 = vld [vmem:[#allocation5 + $0x828] sm:$0xff]
    %v352 = vld [vmem:[#allocation5 + $0x830] sm:$0xff]
    %v353 = vld [vmem:[#allocation5 + $0x838] sm:$0xff]
    %v354 = vld [vmem:[#allocation5 + $0x840] sm:$0xff]
    %v355 = vld [vmem:[#allocation5 + $0x848] sm:$0xff]
    %v356 = vld [vmem:[#allocation5 + $0x850] sm:$0xff]
    %v357 = vld [vmem:[#allocation5 + $0x858] sm:$0xff]
    %v358 = vld [vmem:[#allocation5 + $0x860] sm:$0xff]
    %v359 = vld [vmem:[#allocation5 + $0x868] sm:$0xff]
    %v360 = vld [vmem:[#allocation5 + $0x870] sm:$0xff]
    %v361 = vld [vmem:[#allocation5 + $0x878] sm:$0xff]
    %v362 = vld [vmem:[#allocation5 + $0x880] sm:$0xff]
    %v363 = vld [vmem:[#allocation5 + $0x888] sm:$0xff]
    %v364 = vld [vmem:[#allocation5 + $0x890] sm:$0xff]
    %v365 = vld [vmem:[#allocation5 + $0x898] sm:$0xff]
    %v366 = vld [vmem:[#allocation5 + $0x8a0] sm:$0xff]
    %v367 = vld [vmem:[#allocation5 + $0x8a8] sm:$0xff]
    %v368 = vld [vmem:[#allocation5 + $0x8b0] sm:$0xff]
    %v369 = vld [vmem:[#allocation5 + $0x8b8] sm:$0xff]
    %v370 = vld [vmem:[#allocation5 + $0x8c0] sm:$0xff]
    %v371 = vld [vmem:[#allocation5 + $0x8c8] sm:$0xff]
    %v372 = vld [vmem:[#allocation5 + $0x8d0] sm:$0xff]
    %v373 = vld [vmem:[#allocation5 + $0x8d8] sm:$0xff]
    %v374 = vld [vmem:[#allocation5 + $0x8e0] sm:$0xff]
    %v375 = vld [vmem:[#allocation5 + $0x8e8] sm:$0xff]
    %v376 = vld [vmem:[#allocation5 + $0x8f0] sm:$0xff]
    %v377 = vld [vmem:[#allocation5 + $0x8f8] sm:$0xff]
    %v378 = vld [vmem:[#allocation5 + $0x900] sm:$0xff]
    %v379 = vld [vmem:[#allocation5 + $0x908] sm:$0xff]
    %v380 = vld [vmem:[#allocation5 + $0x910] sm:$0xff]
    %v381 = vld [vmem:[#allocation5 + $0x918] sm:$0xff]
    %v382 = vld [vmem:[#allocation5 + $0x920] sm:$0xff]
    %v383 = vld [vmem:[#allocation5 + $0x928] sm:$0xff]
    %v384 = vld [vmem:[#allocation5 + $0x930] sm:$0xff]
    %v385 = vld [vmem:[#allocation5 + $0x938] sm:$0xff]
    %v386 = vld [vmem:[#allocation5 + $0x940] sm:$0xff]
    %v387 = vld [vmem:[#allocation5 + $0x948] sm:$0xff]
    %v388 = vld [vmem:[#allocation5 + $0x950] sm:$0xff]
    %v389 = vld [vmem:[#allocation5 + $0x958] sm:$0xff]
    %v390 = vld [vmem:[#allocation5 + $0x960] sm:$0xff]
    %v391 = vld [vmem:[#allocation5 + $0x968] sm:$0xff]
    %v392 = vld [vmem:[#allocation5 + $0x970] sm:$0xff]
    %v393 = vld [vmem:[#allocation5 + $0x978] sm:$0xff]
    %v394 = vld [vmem:[#allocation5 + $0x980] sm:$0xff]
    %v395 = vld [vmem:[#allocation5 + $0x988] sm:$0xff]
    %v396 = vld [vmem:[#allocation5 + $0x990] sm:$0xff]
    %v397 = vld [vmem:[#allocation5 + $0x998] sm:$0xff]
    %v398 = vld [vmem:[#allocation5 + $0x9a0] sm:$0xff]
    %v399 = vld [vmem:[#allocation5 + $0x9a8] sm:$0xff]
    %v400 = vld [vmem:[#allocation5 + $0x9b0] sm:$0xff]
    %v401 = vld [vmem:[#allocation5 + $0x9b8] sm:$0xff]
    %v402 = vld [vmem:[#allocation5 + $0x9c0] sm:$0xff]
    %v403 = vld [vmem:[#allocation5 + $0x9c8] sm:$0xff]
    %v404 = vld [vmem:[#allocation5 + $0x9d0] sm:$0xff]
    %v405 = vld [vmem:[#allocation5 + $0x9d8] sm:$0xff]
    %v406 = vld [vmem:[#allocation5 + $0x9e0] sm:$0xff]
    %v407 = vld [vmem:[#allocation5 + $0x9e8] sm:$0xff]
    %v408 = vld [vmem:[#allocation5 + $0x9f0] sm:$0xff]
    %v409 = vld [vmem:[#allocation5 + $0x9f8] sm:$0xff]
    %v410 = vld [vmem:[#allocation5 + $0xa00] sm:$0xff]
    %v411 = vld [vmem:[#allocation5 + $0xa08] sm:$0xff]
    %v412 = vld [vmem:[#allocation5 + $0xa10] sm:$0xff]
    %v413 = vld [vmem:[#allocation5 + $0xa18] sm:$0xff]
    %v414 = vld [vmem:[#allocation5 + $0xa20] sm:$0xff]
    %v415 = vld [vmem:[#allocation5 + $0xa28] sm:$0xff]
    %v416 = vld [vmem:[#allocation5 + $0xa30] sm:$0xff]
    %v417 = vld [vmem:[#allocation5 + $0xa38] sm:$0xff]
    %v418 = vld [vmem:[#allocation5 + $0xa40] sm:$0xff]
    %v419 = vld [vmem:[#allocation5 + $0xa48] sm:$0xff]
    %v420 = vld [vmem:[#allocation5 + $0xa50] sm:$0xff]
    %v421 = vld [vmem:[#allocation5 + $0xa58] sm:$0xff]
    %v422 = vld [vmem:[#allocation5 + $0xa60] sm:$0xff]
    %v423 = vld [vmem:[#allocation5 + $0xa68] sm:$0xff]
    %v424 = vld [vmem:[#allocation5 + $0xa70] sm:$0xff]
    %v425 = vld [vmem:[#allocation5 + $0xa78] sm:$0xff]
    %v426 = vld [vmem:[#allocation5 + $0xa80] sm:$0xff]
    %v427 = vld [vmem:[#allocation5 + $0xa88] sm:$0xff]
    %v428 = vld [vmem:[#allocation5 + $0xa90] sm:$0xff]
    %v429 = vld [vmem:[#allocation5 + $0xa98] sm:$0xff]
    %v430 = vld [vmem:[#allocation5 + $0xaa0] sm:$0xff]
    %v431 = vld [vmem:[#allocation5 + $0xaa8] sm:$0xff]
    %v432 = vld [vmem:[#allocation5 + $0xab0] sm:$0xff]
    %v433 = vld [vmem:[#allocation5 + $0xab8] sm:$0xff]
    %v434 = vld [vmem:[#allocation5 + $0xac0] sm:$0xff]
    %v435 = vld [vmem:[#allocation5 + $0xac8] sm:$0xff]
    %v436 = vld [vmem:[#allocation5 + $0xad0] sm:$0xff]
    %v437 = vld [vmem:[#allocation5 + $0xad8] sm:$0xff]
    %v438 = vld [vmem:[#allocation5 + $0xae0] sm:$0xff]
    %v439 = vld [vmem:[#allocation5 + $0xae8] sm:$0xff]
    %v440 = vld [vmem:[#allocation5 + $0xaf0] sm:$0xff]
    %v441 = vld [vmem:[#allocation5 + $0xaf8] sm:$0xff]
    %v442 = vld [vmem:[#allocation5 + $0xb00] sm:$0xff]
    %v443 = vld [vmem:[#allocation5 + $0xb08] sm:$0xff]
    %v444 = vld [vmem:[#allocation5 + $0xb10] sm:$0xff]
    %v445 = vld [vmem:[#allocation5 + $0xb18] sm:$0xff]
    %v446 = vld [vmem:[#allocation5 + $0xb20] sm:$0xff]
    %v447 = vld [vmem:[#allocation5 + $0xb28] sm:$0xff]
    %v448 = vld [vmem:[#allocation5 + $0xb30] sm:$0xff]
    %v449 = vld [vmem:[#allocation5 + $0xb38] sm:$0xff]
    %v450 = vld [vmem:[#allocation5 + $0xb40] sm:$0xff]
    %v451 = vld [vmem:[#allocation5 + $0xb48] sm:$0xff]
    %v452 = vld [vmem:[#allocation5 + $0xb50] sm:$0xff]
    %v453 = vld [vmem:[#allocation5 + $0xb58] sm:$0xff]
    %v454 = vld [vmem:[#allocation5 + $0xb60] sm:$0xff]
    %v455 = vld [vmem:[#allocation5 + $0xb68] sm:$0xff]
    %v456 = vld [vmem:[#allocation5 + $0xb70] sm:$0xff]
    %v457 = vld [vmem:[#allocation5 + $0xb78] sm:$0xff]
    %v458 = vld [vmem:[#allocation5 + $0xb80] sm:$0xff]
    %v459 = vld [vmem:[#allocation5 + $0xb88] sm:$0xff]
    %v460 = vld [vmem:[#allocation5 + $0xb90] sm:$0xff]
    %v461 = vld [vmem:[#allocation5 + $0xb98] sm:$0xff]
    %v462 = vld [vmem:[#allocation5 + $0xba0] sm:$0xff]
    %v463 = vld [vmem:[#allocation5 + $0xba8] sm:$0xff]
    %v464 = vld [vmem:[#allocation5 + $0xbb0] sm:$0xff]
    %v465 = vld [vmem:[#allocation5 + $0xbb8] sm:$0xff]
    %v466 = vld [vmem:[#allocation5 + $0xbc0] sm:$0xff]
    %v467 = vld [vmem:[#allocation5 + $0xbc8] sm:$0xff]
    %v468 = vld [vmem:[#allocation5 + $0xbd0] sm:$0xff]
    %v469 = vld [vmem:[#allocation5 + $0xbd8] sm:$0xff]
    %v470 = vld [vmem:[#allocation5 + $0xbe0] sm:$0xff]
    %v471 = vld [vmem:[#allocation5 + $0xbe8] sm:$0xff]
    %v472 = vld [vmem:[#allocation5 + $0xbf0] sm:$0xff]
    %v473 = vld [vmem:[#allocation5 + $0xbf8] sm:$0xff]
    %v474 = vld [vmem:[#allocation5 + $0xc00] sm:$0xff]
    %v475 = vld [vmem:[#allocation5 + $0xc08] sm:$0xff]
    %v476 = vld [vmem:[#allocation5 + $0xc10] sm:$0xff]
    %v477 = vld [vmem:[#allocation5 + $0xc18] sm:$0xff]
    %v478 = vld [vmem:[#allocation5 + $0xc20] sm:$0xff]
    %v479 = vld [vmem:[#allocation5 + $0xc28] sm:$0xff]
    %v480 = vld [vmem:[#allocation5 + $0xc30] sm:$0xff]
    %v481 = vld [vmem:[#allocation5 + $0xc38] sm:$0xff]
    %v482 = vld [vmem:[#allocation7] sm:$0xf]
    %v484 = vlaneseq
    %v485 = vshrl.u32 %v484, 7
    %v486 = vsub.s32 0, %v485
    %v487 = vrot.slane %v482, %v486
    %v488 = vlaneseq
    %v489 = vshrl.u32 %v488, 7
    %v490 = vsub.s32 1, %v489
    %v491 = vrot.slane %v482, %v490
    %v492 = vlaneseq
    %v493 = vshrl.u32 %v492, 7
    %v494 = vsub.s32 2, %v493
    %v495 = vrot.slane %v482, %v494
    %v496 = vlaneseq
    %v497 = vshrl.u32 %v496, 7
    %v498 = vsub.s32 3, %v497
    %v499 = vrot.slane %v482, %v498
    %vm504 = vcmask 130048
    %v506 = vsel %vm504, %v89, 0
    %508 = vmatprep.subr.mxu0 %v151
    %509 = vmatpush1.msra.mxu0 %v150
    %510 = vmatprep.subr.mxu0 %v147
    %511 = vmatpush1.msra.mxu0 %v146
    %512 = vmatprep.subr.mxu0 %v143
    %513 = vmatpush1.msra.mxu0 %v142
    %514 = vmatprep.subr.mxu0 %v139
    %515 = vmatpush1.msra.mxu0 %v138
    %516 = vmatprep.subr.mxu0 %v135
    %517 = vmatpush1.msra.mxu0 %v134
    %518 = vmatprep.subr.mxu0 %v131
    %519 = vmatpush1.msra.mxu0 %v130
    %520 = vmatprep.subr.mxu0 %v127
    %521 = vmatpush1.msra.mxu0 %v126
    %522 = vmatprep.subr.mxu0 %v123
    %523 = vmatpush1.msra.mxu0 %v122
    %524 = vmatprep.subr.mxu0 %v119
    %525 = vmatpush1.msra.mxu0 %v118
    %526 = vmatprep.subr.mxu0 %v115
    %527 = vmatpush1.msra.mxu0 %v114
    %528 = vmatprep.subr.mxu0 %v111
    %529 = vmatpush1.msra.mxu0 %v110
    %530 = vmatprep.subr.mxu0 %v107
    %531 = vmatpush1.msra.mxu0 %v106
    %532 = vmatprep.subr.mxu0 %v103
    %533 = vmatpush1.msra.mxu0 %v102
    %534 = vmatprep.subr.mxu0 %v99
    %535 = vmatpush1.msra.mxu0 %v98
    %536 = vmatprep.subr.mxu0 %v95
    %537 = vmatpush1.msra.mxu0 %v94
    %538 = vmatprep.subr.mxu0 %v91
    %539 = vmatpush1.msra.mxu0 %v90
    %540 = vmatprep.subr.mxu0 %v215
    %541 = vmatpush2.msra.mxu0 %v214
    %542 = vmatprep.subr.mxu0 %v211
    %543 = vmatpush2.msra.mxu0 %v210
    %544 = vmatprep.subr.mxu0 %v207
    %545 = vmatpush2.msra.mxu0 %v206
    %546 = vmatprep.subr.mxu0 %v203
    %547 = vmatpush2.msra.mxu0 %v202
    %548 = vmatprep.subr.mxu0 %v199
    %549 = vmatpush2.msra.mxu0 %v198
    %550 = vmatprep.subr.mxu0 %v195
    %551 = vmatpush2.msra.mxu0 %v194
    %552 = vmatprep.subr.mxu0 %v191
    %553 = vmatpush2.msra.mxu0 %v190
    %554 = vmatprep.subr.mxu0 %v187
    %555 = vmatpush2.msra.mxu0 %v186
    %556 = vmatprep.subr.mxu0 %v183
    %557 = vmatpush2.msra.mxu0 %v182
    %558 = vmatprep.subr.mxu0 %v179
    %559 = vmatpush2.msra.mxu0 %v178
    %560 = vmatprep.subr.mxu0 %v175
    %561 = vmatpush2.msra.mxu0 %v174
    %562 = vmatprep.subr.mxu0 %v171
    %563 = vmatpush2.msra.mxu0 %v170
    %564 = vmatprep.subr.mxu0 %v167
    %565 = vmatpush2.msra.mxu0 %v166
    %566 = vmatprep.subr.mxu0 %v163
    %567 = vmatpush2.msra.mxu0 %v162
    %568 = vmatprep.subr.mxu0 %v159
    %569 = vmatpush2.msra.mxu0 %v158
    %570 = vmatprep.subr.mxu0 %v155
    %571 = vmatpush2.msra.mxu0 %v154
    %572 = vmatprep.mubr.f32.mxu0 %v84
    %573 = vmatmul.mubr.f32.gmra.mxu0 %v83
    %v574 = vpop.f32.mrf.mxu0
    %v575 = vadd.f32 %v487, %v574
    %v576 = vpop.f32.mrf.mxu0
    %v577 = vadd.f32 %v491, %v576
    %578 = vdwg.mxu0
    %579 = vmatprep.subr.mxu0 %v279
    %580 = vmatpush1.msra.mxu0 %v278
    %581 = vmatprep.subr.mxu0 %v275
    %582 = vmatpush1.msra.mxu0 %v274
    %583 = vmatprep.subr.mxu0 %v271
    %584 = vmatpush1.msra.mxu0 %v270
    %585 = vmatprep.subr.mxu0 %v267
    %586 = vmatpush1.msra.mxu0 %v266
    %587 = vmatprep.subr.mxu0 %v263
    %588 = vmatpush1.msra.mxu0 %v262
    %589 = vmatprep.subr.mxu0 %v259
    %590 = vmatpush1.msra.mxu0 %v258
    %591 = vmatprep.subr.mxu0 %v255
    %592 = vmatpush1.msra.mxu0 %v254
    %593 = vmatprep.subr.mxu0 %v251
    %594 = vmatpush1.msra.mxu0 %v250
    %595 = vmatprep.subr.mxu0 %v247
    %596 = vmatpush1.msra.mxu0 %v246
    %597 = vmatprep.subr.mxu0 %v243
    %598 = vmatpush1.msra.mxu0 %v242
    %599 = vmatprep.subr.mxu0 %v239
    %600 = vmatpush1.msra.mxu0 %v238
    %601 = vmatprep.subr.mxu0 %v235
    %602 = vmatpush1.msra.mxu0 %v234
    %603 = vmatprep.subr.mxu0 %v231
    %604 = vmatpush1.msra.mxu0 %v230
    %605 = vmatprep.subr.mxu0 %v227
    %606 = vmatpush1.msra.mxu0 %v226
    %607 = vmatprep.subr.mxu0 %v223
    %608 = vmatpush1.msra.mxu0 %v222
    %609 = vmatprep.subr.mxu0 %v219
    %610 = vmatpush1.msra.mxu0 %v218
    %611 = vmatprep.subr.mxu0 %v343
    %612 = vmatpush2.msra.mxu0 %v342
    %613 = vmatprep.subr.mxu0 %v339
    %614 = vmatpush2.msra.mxu0 %v338
    %615 = vmatprep.subr.mxu0 %v335
    %616 = vmatpush2.msra.mxu0 %v334
    %617 = vmatprep.subr.mxu0 %v331
    %618 = vmatpush2.msra.mxu0 %v330
    %619 = vmatprep.subr.mxu0 %v327
    %620 = vmatpush2.msra.mxu0 %v326
    %621 = vmatprep.subr.mxu0 %v323
    %622 = vmatpush2.msra.mxu0 %v322
    %623 = vmatprep.subr.mxu0 %v319
    %624 = vmatpush2.msra.mxu0 %v318
    %625 = vmatprep.subr.mxu0 %v315
    %626 = vmatpush2.msra.mxu0 %v314
    %627 = vmatprep.subr.mxu0 %v311
    %628 = vmatpush2.msra.mxu0 %v310
    %629 = vmatprep.subr.mxu0 %v307
    %630 = vmatpush2.msra.mxu0 %v306
    %631 = vmatprep.subr.mxu0 %v303
    %632 = vmatpush2.msra.mxu0 %v302
    %633 = vmatprep.subr.mxu0 %v299
    %634 = vmatpush2.msra.mxu0 %v298
    %635 = vmatprep.subr.mxu0 %v295
    %636 = vmatpush2.msra.mxu0 %v294
    %637 = vmatprep.subr.mxu0 %v291
    %638 = vmatpush2.msra.mxu0 %v290
    %639 = vmatprep.subr.mxu0 %v287
    %640 = vmatpush2.msra.mxu0 %v286
    %641 = vmatprep.subr.mxu0 %v283
    %642 = vmatpush2.msra.mxu0 %v282
    %643 = vmatprep.mubr.f32.mxu0 %v86
    %644 = vmatmul.mubr.f32.gmra.mxu0 %v85
    %v645 = vpop.f32.mrf.mxu0
    %v646 = vadd.f32 %v575, %v645
    %v647 = vpop.f32.mrf.mxu0
    %v648 = vadd.f32 %v577, %v647
    %649 = vdwg.mxu0
    %650 = vmatprep.subr.mxu0 %v407
    %651 = vmatpush1.msra.mxu0 %v406
    %652 = vmatprep.subr.mxu0 %v403
    %653 = vmatpush1.msra.mxu0 %v402
    %654 = vmatprep.subr.mxu0 %v399
    %655 = vmatpush1.msra.mxu0 %v398
    %656 = vmatprep.subr.mxu0 %v395
    %657 = vmatpush1.msra.mxu0 %v394
    %658 = vmatprep.subr.mxu0 %v391
    %659 = vmatpush1.msra.mxu0 %v390
    %660 = vmatprep.subr.mxu0 %v387
    %661 = vmatpush1.msra.mxu0 %v386
    %662 = vmatprep.subr.mxu0 %v383
    %663 = vmatpush1.msra.mxu0 %v382
    %664 = vmatprep.subr.mxu0 %v379
    %665 = vmatpush1.msra.mxu0 %v378
    %666 = vmatprep.subr.mxu0 %v375
    %667 = vmatpush1.msra.mxu0 %v374
    %668 = vmatprep.subr.mxu0 %v371
    %669 = vmatpush1.msra.mxu0 %v370
    %670 = vmatprep.subr.mxu0 %v367
    %671 = vmatpush1.msra.mxu0 %v366
    %672 = vmatprep.subr.mxu0 %v363
    %673 = vmatpush1.msra.mxu0 %v362
    %674 = vmatprep.subr.mxu0 %v359
    %675 = vmatpush1.msra.mxu0 %v358
    %676 = vmatprep.subr.mxu0 %v355
    %677 = vmatpush1.msra.mxu0 %v354
    %678 = vmatprep.subr.mxu0 %v351
    %679 = vmatpush1.msra.mxu0 %v350
    %680 = vmatprep.subr.mxu0 %v347
    %681 = vmatpush1.msra.mxu0 %v346
    %682 = vmatprep.subr.mxu0 %v471
    %683 = vmatpush2.msra.mxu0 %v470
    %684 = vmatprep.subr.mxu0 %v467
    %685 = vmatpush2.msra.mxu0 %v466
    %686 = vmatprep.subr.mxu0 %v463
    %687 = vmatpush2.msra.mxu0 %v462
    %688 = vmatprep.subr.mxu0 %v459
    %689 = vmatpush2.msra.mxu0 %v458
    %690 = vmatprep.subr.mxu0 %v455
    %691 = vmatpush2.msra.mxu0 %v454
    %692 = vmatprep.subr.mxu0 %v451
    %693 = vmatpush2.msra.mxu0 %v450
    %694 = vmatprep.subr.mxu0 %v447
    %695 = vmatpush2.msra.mxu0 %v446
    %696 = vmatprep.subr.mxu0 %v443
    %697 = vmatpush2.msra.mxu0 %v442
    %698 = vmatprep.subr.mxu0 %v439
    %699 = vmatpush2.msra.mxu0 %v438
    %700 = vmatprep.subr.mxu0 %v435
    %701 = vmatpush2.msra.mxu0 %v434
    %702 = vmatprep.subr.mxu0 %v431
    %703 = vmatpush2.msra.mxu0 %v430
    %704 = vmatprep.subr.mxu0 %v427
    %705 = vmatpush2.msra.mxu0 %v426
    %706 = vmatprep.subr.mxu0 %v423
    %707 = vmatpush2.msra.mxu0 %v422
    %708 = vmatprep.subr.mxu0 %v419
    %709 = vmatpush2.msra.mxu0 %v418
    %710 = vmatprep.subr.mxu0 %v415
    %711 = vmatpush2.msra.mxu0 %v414
    %712 = vmatprep.subr.mxu0 %v411
    %713 = vmatpush2.msra.mxu0 %v410
    %714 = vmatprep.mubr.f32.mxu0 %v88
    %715 = vmatmul.mubr.f32.gmra.mxu0 %v87
    %v716 = vpop.f32.mrf.mxu0
    %v717 = vadd.f32 %v646, %v716
    %v718 = vpop.f32.mrf.mxu0
    %v719 = vadd.f32 %v648, %v718
    %720 = vdwg.mxu0
    %721 = vmatprep.subr.mxu0 0.0
    %722 = vmatpush1.msra.mxu0 0.0
    %723 = vmatprep.subr.mxu0 0.0
    %724 = vmatpush1.msra.mxu0 0.0
    %725 = vmatprep.subr.mxu0 0.0
    %726 = vmatpush1.msra.mxu0 0.0
    %727 = vmatprep.subr.mxu0 0.0
    %728 = vmatpush1.msra.mxu0 0.0
    %729 = vmatprep.subr.mxu0 0.0
    %730 = vmatpush1.msra.mxu0 0.0
    %731 = vmatprep.subr.mxu0 0.0
    %732 = vmatpush1.msra.mxu0 0.0
    %733 = vmatprep.subr.mxu0 0.0
    %734 = vmatpush1.msra.mxu0 0.0
    %735 = vmatprep.subr.mxu0 0.0
    %736 = vmatpush1.msra.mxu0 0.0
    %737 = vmatprep.subr.mxu0 0.0
    %738 = vmatpush1.msra.mxu0 0.0
    %739 = vmatprep.subr.mxu0 0.0
    %740 = vmatpush1.msra.mxu0 0.0
    %741 = vmatprep.subr.mxu0 0.0
    %742 = vmatpush1.msra.mxu0 0.0
    %743 = vmatprep.subr.mxu0 0.0
    %744 = vmatpush1.msra.mxu0 0.0
    %745 = vmatprep.subr.mxu0 0.0
    %746 = vmatpush1.msra.mxu0 0.0
    %747 = vmatprep.subr.mxu0 0.0
    %748 = vmatpush1.msra.mxu0 0.0
    %749 = vmatprep.subr.mxu0 %v479
    %750 = vmatpush1.msra.mxu0 %v478
    %751 = vmatprep.subr.mxu0 %v475
    %752 = vmatpush1.msra.mxu0 %v474
    %753 = vmatprep.subr.mxu0 0.0
    %754 = vmatpush2.msra.mxu0 0.0
    %755 = vmatprep.subr.mxu0 0.0
    %756 = vmatpush2.msra.mxu0 0.0
    %757 = vmatprep.subr.mxu0 0.0
    %758 = vmatpush2.msra.mxu0 0.0
    %759 = vmatprep.subr.mxu0 0.0
    %760 = vmatpush2.msra.mxu0 0.0
    %761 = vmatprep.subr.mxu0 0.0
    %762 = vmatpush2.msra.mxu0 0.0
    %763 = vmatprep.subr.mxu0 0.0
    %764 = vmatpush2.msra.mxu0 0.0
    %765 = vmatprep.subr.mxu0 0.0
    %766 = vmatpush2.msra.mxu0 0.0
    %767 = vmatprep.subr.mxu0 0.0
    %768 = vmatpush2.msra.mxu0 0.0
    %769 = vmatprep.subr.mxu0 0.0
    %770 = vmatpush2.msra.mxu0 0.0
    %771 = vmatprep.subr.mxu0 0.0
    %772 = vmatpush2.msra.mxu0 0.0
    %773 = vmatprep.subr.mxu0 0.0
    %774 = vmatpush2.msra.mxu0 0.0
    %775 = vmatprep.subr.mxu0 0.0
    %776 = vmatpush2.msra.mxu0 0.0
    %777 = vmatprep.subr.mxu0 0.0
    %778 = vmatpush2.msra.mxu0 0.0
    %779 = vmatprep.subr.mxu0 0.0
    %780 = vmatpush2.msra.mxu0 0.0
    %781 = vmatprep.subr.mxu0 0.0
    %782 = vmatpush2.msra.mxu0 0.0
    %783 = vmatprep.subr.mxu0 0.0
    %784 = vmatpush2.msra.mxu0 0.0
    %785 = vmatprep.mubr.f32.mxu0 0.0
    %786 = vmatmul.mubr.f32.gmra.mxu0 %v506
    %v787 = vpop.f32.mrf.mxu0
    %v788 = vadd.f32 %v717, %v787
    %v789 = vpop.f32.mrf.mxu0
    %v790 = vadd.f32 %v719, %v789
    %791 = vdwg.mxu0
    %792 = vmatprep.subr.mxu0 %v153
    %793 = vmatpush1.msra.mxu0 %v152
    %794 = vmatprep.subr.mxu0 %v149
    %795 = vmatpush1.msra.mxu0 %v148
    %796 = vmatprep.subr.mxu0 %v145
    %797 = vmatpush1.msra.mxu0 %v144
    %798 = vmatprep.subr.mxu0 %v141
    %799 = vmatpush1.msra.mxu0 %v140
    %800 = vmatprep.subr.mxu0 %v137
    %801 = vmatpush1.msra.mxu0 %v136
    %802 = vmatprep.subr.mxu0 %v133
    %803 = vmatpush1.msra.mxu0 %v132
    %804 = vmatprep.subr.mxu0 %v129
    %805 = vmatpush1.msra.mxu0 %v128
    %806 = vmatprep.subr.mxu0 %v125
    %807 = vmatpush1.msra.mxu0 %v124
    %808 = vmatprep.subr.mxu0 %v121
    %809 = vmatpush1.msra.mxu0 %v120
    %810 = vmatprep.subr.mxu0 %v117
    %811 = vmatpush1.msra.mxu0 %v116
    %812 = vmatprep.subr.mxu0 %v113
    %813 = vmatpush1.msra.mxu0 %v112
    %814 = vmatprep.subr.mxu0 %v109
    %815 = vmatpush1.msra.mxu0 %v108
    %816 = vmatprep.subr.mxu0 %v105
    %817 = vmatpush1.msra.mxu0 %v104
    %818 = vmatprep.subr.mxu0 %v101
    %819 = vmatpush1.msra.mxu0 %v100
    %820 = vmatprep.subr.mxu0 %v97
    %821 = vmatpush1.msra.mxu0 %v96
    %822 = vmatprep.subr.mxu0 %v93
    %823 = vmatpush1.msra.mxu0 %v92
    %824 = vmatprep.subr.mxu0 %v217
    %825 = vmatpush2.msra.mxu0 %v216
    %826 = vmatprep.subr.mxu0 %v213
    %827 = vmatpush2.msra.mxu0 %v212
    %828 = vmatprep.subr.mxu0 %v209
    %829 = vmatpush2.msra.mxu0 %v208
    %830 = vmatprep.subr.mxu0 %v205
    %831 = vmatpush2.msra.mxu0 %v204
    %832 = vmatprep.subr.mxu0 %v201
    %833 = vmatpush2.msra.mxu0 %v200
    %834 = vmatprep.subr.mxu0 %v197
    %835 = vmatpush2.msra.mxu0 %v196
    %836 = vmatprep.subr.mxu0 %v193
    %837 = vmatpush2.msra.mxu0 %v192
    %838 = vmatprep.subr.mxu0 %v189
    %839 = vmatpush2.msra.mxu0 %v188
    %840 = vmatprep.subr.mxu0 %v185
    %841 = vmatpush2.msra.mxu0 %v184
    %842 = vmatprep.subr.mxu0 %v181
    %843 = vmatpush2.msra.mxu0 %v180
    %844 = vmatprep.subr.mxu0 %v177
    %845 = vmatpush2.msra.mxu0 %v176
    %846 = vmatprep.subr.mxu0 %v173
    %847 = vmatpush2.msra.mxu0 %v172
    %848 = vmatprep.subr.mxu0 %v169
    %849 = vmatpush2.msra.mxu0 %v168
    %850 = vmatprep.subr.mxu0 %v165
    %851 = vmatpush2.msra.mxu0 %v164
    %852 = vmatprep.subr.mxu0 %v161
    %853 = vmatpush2.msra.mxu0 %v160
    %854 = vmatprep.subr.mxu0 %v157
    %855 = vmatpush2.msra.mxu0 %v156
    %856 = vmatprep.mubr.f32.mxu0 %v84
    %857 = vmatmul.mubr.f32.gmra.mxu0 %v83
    %v858 = vpop.f32.mrf.mxu0
    %v859 = vadd.f32 %v495, %v858
    %v860 = vpop.f32.mrf.mxu0
    %v861 = vadd.f32 %v499, %v860
    %862 = vdwg.mxu0
    %863 = vmatprep.subr.mxu0 %v281
    %864 = vmatpush1.msra.mxu0 %v280
    %865 = vmatprep.subr.mxu0 %v277
    %866 = vmatpush1.msra.mxu0 %v276
    %867 = vmatprep.subr.mxu0 %v273
    %868 = vmatpush1.msra.mxu0 %v272
    %869 = vmatprep.subr.mxu0 %v269
    %870 = vmatpush1.msra.mxu0 %v268
    %871 = vmatprep.subr.mxu0 %v265
    %872 = vmatpush1.msra.mxu0 %v264
    %873 = vmatprep.subr.mxu0 %v261
    %874 = vmatpush1.msra.mxu0 %v260
    %875 = vmatprep.subr.mxu0 %v257
    %876 = vmatpush1.msra.mxu0 %v256
    %877 = vmatprep.subr.mxu0 %v253
    %878 = vmatpush1.msra.mxu0 %v252
    %879 = vmatprep.subr.mxu0 %v249
    %880 = vmatpush1.msra.mxu0 %v248
    %881 = vmatprep.subr.mxu0 %v245
    %882 = vmatpush1.msra.mxu0 %v244
    %883 = vmatprep.subr.mxu0 %v241
    %884 = vmatpush1.msra.mxu0 %v240
    %885 = vmatprep.subr.mxu0 %v237
    %886 = vmatpush1.msra.mxu0 %v236
    %887 = vmatprep.subr.mxu0 %v233
    %888 = vmatpush1.msra.mxu0 %v232
    %889 = vmatprep.subr.mxu0 %v229
    %890 = vmatpush1.msra.mxu0 %v228
    %891 = vmatprep.subr.mxu0 %v225
    %892 = vmatpush1.msra.mxu0 %v224
    %893 = vmatprep.subr.mxu0 %v221
    %894 = vmatpush1.msra.mxu0 %v220
    %895 = vmatprep.subr.mxu0 %v345
    %896 = vmatpush2.msra.mxu0 %v344
    %897 = vmatprep.subr.mxu0 %v341
    %898 = vmatpush2.msra.mxu0 %v340
    %899 = vmatprep.subr.mxu0 %v337
    %900 = vmatpush2.msra.mxu0 %v336
    %901 = vmatprep.subr.mxu0 %v333
    %902 = vmatpush2.msra.mxu0 %v332
    %903 = vmatprep.subr.mxu0 %v329
    %904 = vmatpush2.msra.mxu0 %v328
    %905 = vmatprep.subr.mxu0 %v325
    %906 = vmatpush2.msra.mxu0 %v324
    %907 = vmatprep.subr.mxu0 %v321
    %908 = vmatpush2.msra.mxu0 %v320
    %909 = vmatprep.subr.mxu0 %v317
    %910 = vmatpush2.msra.mxu0 %v316
    %911 = vmatprep.subr.mxu0 %v313
    %912 = vmatpush2.msra.mxu0 %v312
    %913 = vmatprep.subr.mxu0 %v309
    %914 = vmatpush2.msra.mxu0 %v308
    %915 = vmatprep.subr.mxu0 %v305
    %916 = vmatpush2.msra.mxu0 %v304
    %917 = vmatprep.subr.mxu0 %v301
    %918 = vmatpush2.msra.mxu0 %v300
    %919 = vmatprep.subr.mxu0 %v297
    %920 = vmatpush2.msra.mxu0 %v296
    %921 = vmatprep.subr.mxu0 %v293
    %922 = vmatpush2.msra.mxu0 %v292
    %923 = vmatprep.subr.mxu0 %v289
    %924 = vmatpush2.msra.mxu0 %v288
    %925 = vmatprep.subr.mxu0 %v285
    %926 = vmatpush2.msra.mxu0 %v284
    %927 = vmatprep.mubr.f32.mxu0 %v86
    %928 = vmatmul.mubr.f32.gmra.mxu0 %v85
    %v929 = vpop.f32.mrf.mxu0
    %v930 = vadd.f32 %v859, %v929
    %v931 = vpop.f32.mrf.mxu0
    %v932 = vadd.f32 %v861, %v931
    %933 = vdwg.mxu0
    %934 = vmatprep.subr.mxu0 %v409
    %935 = vmatpush1.msra.mxu0 %v408
    %936 = vmatprep.subr.mxu0 %v405
    %937 = vmatpush1.msra.mxu0 %v404
    %938 = vmatprep.subr.mxu0 %v401
    %939 = vmatpush1.msra.mxu0 %v400
    %940 = vmatprep.subr.mxu0 %v397
    %941 = vmatpush1.msra.mxu0 %v396
    %942 = vmatprep.subr.mxu0 %v393
    %943 = vmatpush1.msra.mxu0 %v392
    %944 = vmatprep.subr.mxu0 %v389
    %945 = vmatpush1.msra.mxu0 %v388
    %946 = vmatprep.subr.mxu0 %v385
    %947 = vmatpush1.msra.mxu0 %v384
    %948 = vmatprep.subr.mxu0 %v381
    %949 = vmatpush1.msra.mxu0 %v380
    %950 = vmatprep.subr.mxu0 %v377
    %951 = vmatpush1.msra.mxu0 %v376
    %952 = vmatprep.subr.mxu0 %v373
    %953 = vmatpush1.msra.mxu0 %v372
    %954 = vmatprep.subr.mxu0 %v369
    %955 = vmatpush1.msra.mxu0 %v368
    %956 = vmatprep.subr.mxu0 %v365
    %957 = vmatpush1.msra.mxu0 %v364
    %958 = vmatprep.subr.mxu0 %v361
    %959 = vmatpush1.msra.mxu0 %v360
    %960 = vmatprep.subr.mxu0 %v357
    %961 = vmatpush1.msra.mxu0 %v356
    %962 = vmatprep.subr.mxu0 %v353
    %963 = vmatpush1.msra.mxu0 %v352
    %964 = vmatprep.subr.mxu0 %v349
    %965 = vmatpush1.msra.mxu0 %v348
    %966 = vmatprep.subr.mxu0 %v473
    %967 = vmatpush2.msra.mxu0 %v472
    %968 = vmatprep.subr.mxu0 %v469
    %969 = vmatpush2.msra.mxu0 %v468
    %970 = vmatprep.subr.mxu0 %v465
    %971 = vmatpush2.msra.mxu0 %v464
    %972 = vmatprep.subr.mxu0 %v461
    %973 = vmatpush2.msra.mxu0 %v460
    %974 = vmatprep.subr.mxu0 %v457
    %975 = vmatpush2.msra.mxu0 %v456
    %976 = vmatprep.subr.mxu0 %v453
    %977 = vmatpush2.msra.mxu0 %v452
    %978 = vmatprep.subr.mxu0 %v449
    %979 = vmatpush2.msra.mxu0 %v448
    %980 = vmatprep.subr.mxu0 %v445
    %981 = vmatpush2.msra.mxu0 %v444
    %982 = vmatprep.subr.mxu0 %v441
    %983 = vmatpush2.msra.mxu0 %v440
    %984 = vmatprep.subr.mxu0 %v437
    %985 = vmatpush2.msra.mxu0 %v436
    %986 = vmatprep.subr.mxu0 %v433
    %987 = vmatpush2.msra.mxu0 %v432
    %988 = vmatprep.subr.mxu0 %v429
    %989 = vmatpush2.msra.mxu0 %v428
    %990 = vmatprep.subr.mxu0 %v425
    %991 = vmatpush2.msra.mxu0 %v424
    %992 = vmatprep.subr.mxu0 %v421
    %993 = vmatpush2.msra.mxu0 %v420
    %994 = vmatprep.subr.mxu0 %v417
    %995 = vmatpush2.msra.mxu0 %v416
    %996 = vmatprep.subr.mxu0 %v413
    %997 = vmatpush2.msra.mxu0 %v412
    %998 = vmatprep.mubr.f32.mxu0 %v88
    %999 = vmatmul.mubr.f32.gmra.mxu0 %v87
    %v1000 = vpop.f32.mrf.mxu0
    %v1001 = vadd.f32 %v930, %v1000
    %v1002 = vpop.f32.mrf.mxu0
    %v1003 = vadd.f32 %v932, %v1002
    %1004 = vdwg.mxu0
    %1005 = vmatprep.subr.mxu0 0.0
    %1006 = vmatpush1.msra.mxu0 0.0
    %1007 = vmatprep.subr.mxu0 0.0
    %1008 = vmatpush1.msra.mxu0 0.0
    %1009 = vmatprep.subr.mxu0 0.0
    %1010 = vmatpush1.msra.mxu0 0.0
    %1011 = vmatprep.subr.mxu0 0.0
    %1012 = vmatpush1.msra.mxu0 0.0
    %1013 = vmatprep.subr.mxu0 0.0
    %1014 = vmatpush1.msra.mxu0 0.0
    %1015 = vmatprep.subr.mxu0 0.0
    %1016 = vmatpush1.msra.mxu0 0.0
    %1017 = vmatprep.subr.mxu0 0.0
    %1018 = vmatpush1.msra.mxu0 0.0
    %1019 = vmatprep.subr.mxu0 0.0
    %1020 = vmatpush1.msra.mxu0 0.0
    %1021 = vmatprep.subr.mxu0 0.0
    %1022 = vmatpush1.msra.mxu0 0.0
    %1023 = vmatprep.subr.mxu0 0.0
    %1024 = vmatpush1.msra.mxu0 0.0
    %1025 = vmatprep.subr.mxu0 0.0
    %1026 = vmatpush1.msra.mxu0 0.0
    %1027 = vmatprep.subr.mxu0 0.0
    %1028 = vmatpush1.msra.mxu0 0.0
    %1029 = vmatprep.subr.mxu0 0.0
    %1030 = vmatpush1.msra.mxu0 0.0
    %1031 = vmatprep.subr.mxu0 0.0
    %1032 = vmatpush1.msra.mxu0 0.0
    %1033 = vmatprep.subr.mxu0 %v481
    %1034 = vmatpush1.msra.mxu0 %v480
    %1035 = vmatprep.subr.mxu0 %v477
    %1036 = vmatpush1.msra.mxu0 %v476
    %1037 = vmatprep.subr.mxu0 0.0
    %1038 = vmatpush2.msra.mxu0 0.0
    %1039 = vmatprep.subr.mxu0 0.0
    %1040 = vmatpush2.msra.mxu0 0.0
    %1041 = vmatprep.subr.mxu0 0.0
    %1042 = vmatpush2.msra.mxu0 0.0
    %1043 = vmatprep.subr.mxu0 0.0
    %1044 = vmatpush2.msra.mxu0 0.0
    %1045 = vmatprep.subr.mxu0 0.0
    %1046 = vmatpush2.msra.mxu0 0.0
    %1047 = vmatprep.subr.mxu0 0.0
    %1048 = vmatpush2.msra.mxu0 0.0
    %1049 = vmatprep.subr.mxu0 0.0
    %1050 = vmatpush2.msra.mxu0 0.0
    %1051 = vmatprep.subr.mxu0 0.0
    %1052 = vmatpush2.msra.mxu0 0.0
    %1053 = vmatprep.subr.mxu0 0.0
    %1054 = vmatpush2.msra.mxu0 0.0
    %1055 = vmatprep.subr.mxu0 0.0
    %1056 = vmatpush2.msra.mxu0 0.0
    %1057 = vmatprep.subr.mxu0 0.0
    %1058 = vmatpush2.msra.mxu0 0.0
    %1059 = vmatprep.subr.mxu0 0.0
    %1060 = vmatpush2.msra.mxu0 0.0
    %1061 = vmatprep.subr.mxu0 0.0
    %1062 = vmatpush2.msra.mxu0 0.0
    %1063 = vmatprep.subr.mxu0 0.0
    %1064 = vmatpush2.msra.mxu0 0.0
    %1065 = vmatprep.subr.mxu0 0.0
    %1066 = vmatpush2.msra.mxu0 0.0
    %1067 = vmatprep.subr.mxu0 0.0
    %1068 = vmatpush2.msra.mxu0 0.0
    %1069 = vmatprep.mubr.f32.mxu0 0.0
    %1070 = vmatmul.mubr.f32.gmra.mxu0 %v506
    %v1071 = vpop.f32.mrf.mxu0
    %v1072 = vadd.f32 %v1001, %v1071
    %v1073 = vpop.f32.mrf.mxu0
    %v1074 = vadd.f32 %v1003, %v1073
    %1075 = vdwg.mxu0
    %v1076 = vmax.f32 %v788, 0.0
    %v1077 = vmax.f32 %v790, 0.0
    %v1078 = vmax.f32 %v1072, 0.0
    %v1079 = vmax.f32 %v1074, 0.0
    %v1080 = vld [vmem:[#allocation8] sm:$0xff]
    %v1081 = vld [vmem:[#allocation8 + $0x8] sm:$0xff]
    %v1082 = vld [vmem:[#allocation8 + $0x10] sm:$0xff]
    %v1083 = vld [vmem:[#allocation8 + $0x18] sm:$0xff]
    %v1084 = vld [vmem:[#allocation8 + $0x20] sm:$0xff]
    %v1085 = vld [vmem:[#allocation8 + $0x28] sm:$0xff]
    %v1086 = vld [vmem:[#allocation8 + $0x30] sm:$0xff]
    %v1087 = vld [vmem:[#allocation8 + $0x38] sm:$0xff]
    %v1088 = vld [vmem:[#allocation8 + $0x40] sm:$0xff]
    %v1089 = vld [vmem:[#allocation8 + $0x48] sm:$0xff]
    %v1090 = vld [vmem:[#allocation8 + $0x50] sm:$0xff]
    %v1091 = vld [vmem:[#allocation8 + $0x58] sm:$0xff]
    %v1092 = vld [vmem:[#allocation8 + $0x60] sm:$0xff]
    %v1093 = vld [vmem:[#allocation8 + $0x68] sm:$0xff]
    %v1094 = vld [vmem:[#allocation8 + $0x70] sm:$0xff]
    %v1095 = vld [vmem:[#allocation8 + $0x78] sm:$0xff]
    %v1096 = vld [vmem:[#allocation8 + $0x80] sm:$0xff]
    %v1097 = vld [vmem:[#allocation8 + $0x88] sm:$0xff]
    %v1098 = vld [vmem:[#allocation8 + $0x90] sm:$0xff]
    %v1099 = vld [vmem:[#allocation8 + $0x98] sm:$0xff]
    %v1100 = vld [vmem:[#allocation8 + $0xa0] sm:$0xff]
    %v1101 = vld [vmem:[#allocation8 + $0xa8] sm:$0xff]
    %v1102 = vld [vmem:[#allocation8 + $0xb0] sm:$0xff]
    %v1103 = vld [vmem:[#allocation8 + $0xb8] sm:$0xff]
    %v1104 = vld [vmem:[#allocation8 + $0xc0] sm:$0xff]
    %v1105 = vld [vmem:[#allocation8 + $0xc8] sm:$0xff]
    %v1106 = vld [vmem:[#allocation8 + $0xd0] sm:$0xff]
    %v1107 = vld [vmem:[#allocation8 + $0xd8] sm:$0xff]
    %v1108 = vld [vmem:[#allocation8 + $0xe0] sm:$0xff]
    %v1109 = vld [vmem:[#allocation8 + $0xe8] sm:$0xff]
    %v1110 = vld [vmem:[#allocation8 + $0xf0] sm:$0xff]
    %v1111 = vld [vmem:[#allocation8 + $0xf8] sm:$0xff]
    %v1112 = vld [vmem:[#allocation8 + $0x100] sm:$0xff]
    %v1113 = vld [vmem:[#allocation8 + $0x108] sm:$0xff]
    %v1114 = vld [vmem:[#allocation8 + $0x110] sm:$0xff]
    %v1115 = vld [vmem:[#allocation8 + $0x118] sm:$0xff]
    %v1116 = vld [vmem:[#allocation8 + $0x120] sm:$0xff]
    %v1117 = vld [vmem:[#allocation8 + $0x128] sm:$0xff]
    %v1118 = vld [vmem:[#allocation8 + $0x130] sm:$0xff]
    %v1119 = vld [vmem:[#allocation8 + $0x138] sm:$0xff]
    %v1120 = vld [vmem:[#allocation8 + $0x140] sm:$0xff]
    %v1121 = vld [vmem:[#allocation8 + $0x148] sm:$0xff]
    %v1122 = vld [vmem:[#allocation8 + $0x150] sm:$0xff]
    %v1123 = vld [vmem:[#allocation8 + $0x158] sm:$0xff]
    %v1124 = vld [vmem:[#allocation8 + $0x160] sm:$0xff]
    %v1125 = vld [vmem:[#allocation8 + $0x168] sm:$0xff]
    %v1126 = vld [vmem:[#allocation8 + $0x170] sm:$0xff]
    %v1127 = vld [vmem:[#allocation8 + $0x178] sm:$0xff]
    %v1128 = vld [vmem:[#allocation8 + $0x180] sm:$0xff]
    %v1129 = vld [vmem:[#allocation8 + $0x188] sm:$0xff]
    %v1130 = vld [vmem:[#allocation8 + $0x190] sm:$0xff]
    %v1131 = vld [vmem:[#allocation8 + $0x198] sm:$0xff]
    %v1132 = vld [vmem:[#allocation8 + $0x1a0] sm:$0xff]
    %v1133 = vld [vmem:[#allocation8 + $0x1a8] sm:$0xff]
    %v1134 = vld [vmem:[#allocation8 + $0x1b0] sm:$0xff]
    %v1135 = vld [vmem:[#allocation8 + $0x1b8] sm:$0xff]
    %v1136 = vld [vmem:[#allocation8 + $0x1c0] sm:$0xff]
    %v1137 = vld [vmem:[#allocation8 + $0x1c8] sm:$0xff]
    %v1138 = vld [vmem:[#allocation8 + $0x1d0] sm:$0xff]
    %v1139 = vld [vmem:[#allocation8 + $0x1d8] sm:$0xff]
    %v1140 = vld [vmem:[#allocation8 + $0x1e0] sm:$0xff]
    %v1141 = vld [vmem:[#allocation8 + $0x1e8] sm:$0xff]
    %v1142 = vld [vmem:[#allocation8 + $0x1f0] sm:$0xff]
    %v1143 = vld [vmem:[#allocation8 + $0x1f8] sm:$0xff]
    %v1144 = vld [vmem:[#allocation10] sm:$0x1]
    %v1146 = vlaneseq
    %v1147 = vshrl.u32 %v1146, 7
    %v1148 = vsub.s32 0, %v1147
    %v1149 = vrot.slane %v1144, %v1148
    %1151 = vmatprep.subr.mxu0 0.0
    %1152 = vmatpush1.msra.mxu0 %v1095
    %1153 = vmatprep.subr.mxu0 0.0
    %1154 = vmatpush1.msra.mxu0 %v1094
    %1155 = vmatprep.subr.mxu0 0.0
    %1156 = vmatpush1.msra.mxu0 %v1093
    %1157 = vmatprep.subr.mxu0 0.0
    %1158 = vmatpush1.msra.mxu0 %v1092
    %1159 = vmatprep.subr.mxu0 0.0
    %1160 = vmatpush1.msra.mxu0 %v1091
    %1161 = vmatprep.subr.mxu0 0.0
    %1162 = vmatpush1.msra.mxu0 %v1090
    %1163 = vmatprep.subr.mxu0 0.0
    %1164 = vmatpush1.msra.mxu0 %v1089
    %1165 = vmatprep.subr.mxu0 0.0
    %1166 = vmatpush1.msra.mxu0 %v1088
    %1167 = vmatprep.subr.mxu0 0.0
    %1168 = vmatpush1.msra.mxu0 %v1087
    %1169 = vmatprep.subr.mxu0 0.0
    %1170 = vmatpush1.msra.mxu0 %v1086
    %1171 = vmatprep.subr.mxu0 0.0
    %1172 = vmatpush1.msra.mxu0 %v1085
    %1173 = vmatprep.subr.mxu0 0.0
    %1174 = vmatpush1.msra.mxu0 %v1084
    %1175 = vmatprep.subr.mxu0 0.0
    %1176 = vmatpush1.msra.mxu0 %v1083
    %1177 = vmatprep.subr.mxu0 0.0
    %1178 = vmatpush1.msra.mxu0 %v1082
    %1179 = vmatprep.subr.mxu0 0.0
    %1180 = vmatpush1.msra.mxu0 %v1081
    %1181 = vmatprep.subr.mxu0 0.0
    %1182 = vmatpush1.msra.mxu0 %v1080
    %1183 = vmatprep.subr.mxu0 0.0
    %1184 = vmatpush2.msra.mxu0 %v1111
    %1185 = vmatprep.subr.mxu0 0.0
    %1186 = vmatpush2.msra.mxu0 %v1110
    %1187 = vmatprep.subr.mxu0 0.0
    %1188 = vmatpush2.msra.mxu0 %v1109
    %1189 = vmatprep.subr.mxu0 0.0
    %1190 = vmatpush2.msra.mxu0 %v1108
    %1191 = vmatprep.subr.mxu0 0.0
    %1192 = vmatpush2.msra.mxu0 %v1107
    %1193 = vmatprep.subr.mxu0 0.0
    %1194 = vmatpush2.msra.mxu0 %v1106
    %1195 = vmatprep.subr.mxu0 0.0
    %1196 = vmatpush2.msra.mxu0 %v1105
    %1197 = vmatprep.subr.mxu0 0.0
    %1198 = vmatpush2.msra.mxu0 %v1104
    %1199 = vmatprep.subr.mxu0 0.0
    %1200 = vmatpush2.msra.mxu0 %v1103
    %1201 = vmatprep.subr.mxu0 0.0
    %1202 = vmatpush2.msra.mxu0 %v1102
    %1203 = vmatprep.subr.mxu0 0.0
    %1204 = vmatpush2.msra.mxu0 %v1101
    %1205 = vmatprep.subr.mxu0 0.0
    %1206 = vmatpush2.msra.mxu0 %v1100
    %1207 = vmatprep.subr.mxu0 0.0
    %1208 = vmatpush2.msra.mxu0 %v1099
    %1209 = vmatprep.subr.mxu0 0.0
    %1210 = vmatpush2.msra.mxu0 %v1098
    %1211 = vmatprep.subr.mxu0 0.0
    %1212 = vmatpush2.msra.mxu0 %v1097
    %1213 = vmatprep.subr.mxu0 0.0
    %1214 = vmatpush2.msra.mxu0 %v1096
    %1215 = vmatprep.mubr.f32.mxu0 %v1077
    %1216 = vmatmul.mubr.f32.gmra.mxu0 %v1076
    %v1217 = vpop.f32.mrf.mxu0
    %v1218 = vadd.f32 %v1149, %v1217
    %v1219 = vpop.f32.mrf.mxu0
    %1220 = vdwg.mxu0
    %1221 = vmatprep.subr.mxu0 0.0
    %1222 = vmatpush1.msra.mxu0 %v1127
    %1223 = vmatprep.subr.mxu0 0.0
    %1224 = vmatpush1.msra.mxu0 %v1126
    %1225 = vmatprep.subr.mxu0 0.0
    %1226 = vmatpush1.msra.mxu0 %v1125
    %1227 = vmatprep.subr.mxu0 0.0
    %1228 = vmatpush1.msra.mxu0 %v1124
    %1229 = vmatprep.subr.mxu0 0.0
    %1230 = vmatpush1.msra.mxu0 %v1123
    %1231 = vmatprep.subr.mxu0 0.0
    %1232 = vmatpush1.msra.mxu0 %v1122
    %1233 = vmatprep.subr.mxu0 0.0
    %1234 = vmatpush1.msra.mxu0 %v1121
    %1235 = vmatprep.subr.mxu0 0.0
    %1236 = vmatpush1.msra.mxu0 %v1120
    %1237 = vmatprep.subr.mxu0 0.0
    %1238 = vmatpush1.msra.mxu0 %v1119
    %1239 = vmatprep.subr.mxu0 0.0
    %1240 = vmatpush1.msra.mxu0 %v1118
    %1241 = vmatprep.subr.mxu0 0.0
    %1242 = vmatpush1.msra.mxu0 %v1117
    %1243 = vmatprep.subr.mxu0 0.0
    %1244 = vmatpush1.msra.mxu0 %v1116
    %1245 = vmatprep.subr.mxu0 0.0
    %1246 = vmatpush1.msra.mxu0 %v1115
    %1247 = vmatprep.subr.mxu0 0.0
    %1248 = vmatpush1.msra.mxu0 %v1114
    %1249 = vmatprep.subr.mxu0 0.0
    %1250 = vmatpush1.msra.mxu0 %v1113
    %1251 = vmatprep.subr.mxu0 0.0
    %1252 = vmatpush1.msra.mxu0 %v1112
    %1253 = vmatprep.subr.mxu0 0.0
    %1254 = vmatpush2.msra.mxu0 %v1143
    %1255 = vmatprep.subr.mxu0 0.0
    %1256 = vmatpush2.msra.mxu0 %v1142
    %1257 = vmatprep.subr.mxu0 0.0
    %1258 = vmatpush2.msra.mxu0 %v1141
    %1259 = vmatprep.subr.mxu0 0.0
    %1260 = vmatpush2.msra.mxu0 %v1140
    %1261 = vmatprep.subr.mxu0 0.0
    %1262 = vmatpush2.msra.mxu0 %v1139
    %1263 = vmatprep.subr.mxu0 0.0
    %1264 = vmatpush2.msra.mxu0 %v1138
    %1265 = vmatprep.subr.mxu0 0.0
    %1266 = vmatpush2.msra.mxu0 %v1137
    %1267 = vmatprep.subr.mxu0 0.0
    %1268 = vmatpush2.msra.mxu0 %v1136
    %1269 = vmatprep.subr.mxu0 0.0
    %1270 = vmatpush2.msra.mxu0 %v1135
    %1271 = vmatprep.subr.mxu0 0.0
    %1272 = vmatpush2.msra.mxu0 %v1134
    %1273 = vmatprep.subr.mxu0 0.0
    %1274 = vmatpush2.msra.mxu0 %v1133
    %1275 = vmatprep.subr.mxu0 0.0
    %1276 = vmatpush2.msra.mxu0 %v1132
    %1277 = vmatprep.subr.mxu0 0.0
    %1278 = vmatpush2.msra.mxu0 %v1131
    %1279 = vmatprep.subr.mxu0 0.0
    %1280 = vmatpush2.msra.mxu0 %v1130
    %1281 = vmatprep.subr.mxu0 0.0
    %1282 = vmatpush2.msra.mxu0 %v1129
    %1283 = vmatprep.subr.mxu0 0.0
    %1284 = vmatpush2.msra.mxu0 %v1128
    %1285 = vmatprep.mubr.f32.mxu0 %v1079
    %1286 = vmatmul.mubr.f32.gmra.mxu0 %v1078
    %v1287 = vpop.f32.mrf.mxu0
    %v1288 = vadd.f32 %v1218, %v1287
    %v1289 = vpop.f32.mrf.mxu0
    %1290 = vdwg.mxu0
    %v1291 = vxor.u32 %v1288, 2147483648
    %v1292 = vmul.f32 %v1291, 1.442695
    %v1293 = vpow.pop %v1292
    %v1294 = vadd.f32 %v1293, 1.0
    %v1295 = vrcp.pop %v1294
    %v1296 = vmul.f32 1.0, %v1295
    %v1297 = vmul.f32 %v1296, 10000.0
    %v1298 = vround.ne.pseudo %v1297
    %v1299 = vrcp.pop 10000.0
    %v1300 = vmul.f32 %v1298, %v1299
    %1301 = vst [vmem:[#allocation11] sm:$0xff] %v1300
    // Predicated region
    $region42: #{digit_classifier.1} parent=1 // pred_check
      _
    $region43: #{digit_classifier.1} parent=1 // pred_check_branch
      %1303 = sbr.rel (0) target = $region45
    $region44: #{digit_classifier.1} parent=1 // pred_region
      %s1305 = ssub.s32 128, 128
      %1306 = vsyncadd [#allocation4], %s1305
      %s1308 = sshll.u32 [#allocation11], 4
      %s1309 = int_to_ptr.vmem [resolvable:$true] %s1308
      %1311 = dma.vmem_to_hbm [thread:$0]  %s1309, 128, %s5, [#allocation4]
    $region45: #{digit_classifier.1} parent=1 // pred_fallthru
      _
    // Predicated region
    $region46: #{digit_classifier.1} parent=1 // pred_check
      _
    $region47: #{digit_classifier.1} parent=1 // pred_check_branch
      %1313 = sbr.rel (0) target = $region49
    $region48: #{digit_classifier.1} parent=1 // pred_region
      %1314 = dma.done [#allocation4], 128
    $region49: #{digit_classifier.1} parent=1 // pred_fallthru
      _
    %1315 = vsyncpa [#allocation3], 1
    %1316 = vsyncpa [#allocation6], 1
    %1317 = vsyncpa [#allocation9], 1
    %1318 = vsyncpa [#allocation4], 1

</llo_original>
